<compile_context>
chip_gen: v6e
topology: v6e:2x2x1
jax: 0.10.0
libtpu: 0.0.40
codegen_flags: <defaults>
</compile_context>

<pallas_src>
import jax
import jax.numpy as jnp
from jax.experimental import pallas as pl
from jax.experimental.pallas import tpu as pltpu


# ----------------------------------------------------------------------------
# Kernel: one batch tile through the whole MLP + softplus + rsample epilogue.
# ----------------------------------------------------------------------------
def dynamic_predictor_kernel(
    h_ref,                       # [Bt, H]      bf16
    w1_ref, b1_ref,              # [H, 2H] bf16, [1, 2H] f32
    w2_ref, b2_ref,              # [2H, 2H] bf16, [1, 2H] f32
    w3_ref, b3_ref,              # [2H, H] bf16, [1, H] f32
    w4_ref, b4_ref,              # [H, H/2] bf16, [1, H/2] f32
    w5m_ref, b5m_ref,            # [H/2, L] bf16, [1, L] f32   (mean head)
    w5s_ref, b5s_ref,            # [H/2, L] bf16, [1, L] f32   (log_std head)
    eps_ref,                     # [Bt, L]      f32  standard-normal noise
    out_ref,                     # [Bt, 3L]     f32  = concat(mean, std, sample)
):
    cdt = w1_ref.dtype  # MXU compute dtype (bf16)

    def linear_relu(x, w_ref, b_ref):
        # bf16 x bf16 -> f32 accumulate on MXU; bias/ReLU in f32 on VPU;
        # cast back to bf16 only to feed the next MXU dot.
        y = jnp.dot(x, w_ref[...], preferred_element_type=jnp.float32) + b_ref[...]
        return jnp.maximum(y, 0.0).astype(cdt)

    x = linear_relu(h_ref[...], w1_ref, b1_ref)
    x = linear_relu(x, w2_ref, b2_ref)
    x = linear_relu(x, w3_ref, b3_ref)
    x = linear_relu(x, w4_ref, b4_ref)

    # Final layer split into two lane-aligned heads (no cross-lane chunk/slice).
    mean = jnp.dot(x, w5m_ref[...], preferred_element_type=jnp.float32) + b5m_ref[...]
    log_std = jnp.dot(x, w5s_ref[...], preferred_element_type=jnp.float32) + b5s_ref[...]

    # Numerically-stable softplus (matches F.softplus) + 1e-6, all f32.
    std = jnp.maximum(log_std, 0.0) + jnp.log1p(jnp.exp(-jnp.abs(log_std))) + 1e-6
    # Reparameterized sample: mean + std * eps  (== dist.rsample()).
    sample = mean + std * eps_ref[...]

    # Single lane-contiguous output slab: one DMA per tile instead of three.
    out_ref[...] = jnp.concatenate([mean, std, sample], axis=-1)


# ----------------------------------------------------------------------------
# Wrapper
# ----------------------------------------------------------------------------
def dynamic_predictor_forward(h_t, params, eps, *, block_rows=128):
    """Returns (mean, std, sample) of the predicted Normal(mean, std)."""
    B, H = h_t.shape
    L = params["w5m"].shape[1]

    n_tiles = pl.cdiv(B, block_rows)
    B_pad = n_tiles * block_rows
    if B_pad != B:
        h_t = jnp.pad(h_t, ((0, B_pad - B), (0, 0)))
        eps = jnp.pad(eps, ((0, B_pad - B), (0, 0)))
    # Cast activations to bf16 ONCE here (not per grid step inside the kernel).
    h_bf16 = h_t.astype(jnp.bfloat16)
    eps = eps.astype(jnp.float32)

    wkeys = ["w1", "b1", "w2", "b2", "w3", "b3", "w4", "b4",
             "w5m", "b5m", "w5s", "b5s"]
    weight_args = [params[k] for k in wkeys]

    # Activations: tiled along batch. Weights/biases: same block every grid step
    # -> loaded once, resident in VMEM across the whole grid.
    def act_spec(d):
        return pl.BlockSpec((block_rows, d), lambda i: (i, 0))

    def pinned_spec(shape):
        return pl.BlockSpec(shape, lambda i: (0, 0))

    in_specs = ([act_spec(H)]
                + [pinned_spec(params[k].shape) for k in wkeys]
                + [act_spec(L)])
    out_spec = pl.BlockSpec((block_rows, 3 * L), lambda i: (i, 0))

    # Advisory cost estimate for XLA's scheduler.
    H2, Hh = 2 * H, H // 2
    flops = 2 * B_pad * (H * H2 + H2 * H2 + H2 * H + H * Hh + Hh * 2 * L)
    bytes_accessed = (h_bf16.size * 2 + eps.size * 4 + B_pad * 3 * L * 4
                      + sum(int(v.size) * v.dtype.itemsize for v in weight_args))
    cost = pl.CostEstimate(flops=flops,
                           transcendentals=2 * B_pad * L,
                           bytes_accessed=bytes_accessed)

    grid_spec = pltpu.PrefetchScalarGridSpec(
        num_scalar_prefetch=0,
        grid=(n_tiles,),
        in_specs=in_specs,
        out_specs=out_spec,
    )

    out = pl.pallas_call(
        dynamic_predictor_kernel,
        out_shape=jax.ShapeDtypeStruct((B_pad, 3 * L), jnp.float32),
        grid_spec=grid_spec,
        compiler_params=pltpu.CompilerParams(
            dimension_semantics=("parallel",)),  # 2x on v7x (2 TCs), free elsewhere
        cost_estimate=cost,
    )(h_bf16, *weight_args, eps)

    out = out[:B]
    return out[:, :L], out[:, L:2 * L], out[:, 2 * L:]


# ----------------------------------------------------------------------------
# Parameter init (PyTorch-style U(-1/sqrt(fan_in), 1/sqrt(fan_in)))
# ----------------------------------------------------------------------------
def init_params(key, hidden_dim, latent_dim, weight_dtype=jnp.bfloat16):
    h, L = hidden_dim, latent_dim
    dims = [(h, 2 * h), (2 * h, 2 * h), (2 * h, h), (h, h // 2), (h // 2, 2 * L)]
    raw = {}
    for i, (fan_in, fan_out) in enumerate(dims, start=1):
        key, kw, kb = jax.random.split(key, 3)
        bound = 1.0 / (fan_in ** 0.5)
        raw[f"w{i}"] = jax.random.uniform(kw, (fan_in, fan_out), jnp.float32,
                                          -bound, bound)
        raw[f"b{i}"] = jax.random.uniform(kb, (1, fan_out), jnp.float32,
                                          -bound, bound)
    params = {}
    for i in (1, 2, 3, 4):
        params[f"w{i}"] = raw[f"w{i}"].astype(weight_dtype)  # bf16 weights
        params[f"b{i}"] = raw[f"b{i}"]                       # f32 biases
    # Split the [H/2, 2L] head into lane-aligned mean / log_std halves.
    params["w5m"] = raw["w5"][:, :L].astype(weight_dtype)
    params["w5s"] = raw["w5"][:, L:].astype(weight_dtype)
    params["b5m"] = raw["b5"][:, :L]
    params["b5s"] = raw["b5"][:, L:]
    return params


# ----------------------------------------------------------------------------
# Pure-JAX reference (mirrors the kernel's bf16-MXU / f32-VPU mixed precision)
# ----------------------------------------------------------------------------
def reference_forward(h_t, params, eps):
    def lin_relu(x, w, b):
        y = jnp.dot(x.astype(jnp.bfloat16), w,
                    preferred_element_type=jnp.float32) + b
        return jnp.maximum(y, 0.0)

    x = lin_relu(h_t, params["w1"], params["b1"])
    x = lin_relu(x, params["w2"], params["b2"])
    x = lin_relu(x, params["w3"], params["b3"])
    x = lin_relu(x, params["w4"], params["b4"])
    xb = x.astype(jnp.bfloat16)
    mean = jnp.dot(xb, params["w5m"], preferred_element_type=jnp.float32) + params["b5m"]
    log_std = jnp.dot(xb, params["w5s"], preferred_element_type=jnp.float32) + params["b5s"]
    std = jax.nn.softplus(log_std) + 1e-6
    sample = mean + std * eps
    return mean, std, sample


if __name__ == "__main__":
    # Small shapes consistent with the module (config.hidden_dim, config.latent_dim).
    # batch=200 exercises both multi-tile grid (2 x 128-row tiles) and padding.
    batch_size = 200
    hidden_dim = 32
    latent_dim = 8

    root = jax.random.PRNGKey(0)
    k_params, k_h, k_eps = jax.random.split(root, 3)

    params = init_params(k_params, hidden_dim, latent_dim)
    h_t = jax.random.normal(k_h, (batch_size, hidden_dim), jnp.float32)
    # Standard-normal noise for the reparameterized sample (dist.rsample()).
    # TODO(synk): could be generated in-kernel via pltpu.prng_seed/stateful_normal
    # to drop one input DMA; kept as an input for deterministic testing.
    eps = jax.random.normal(k_eps, (batch_size, latent_dim), jnp.float32)

    mean, std, sample = dynamic_predictor_forward(h_t, params, eps)
    jax.block_until_ready((mean, std, sample))

    mean_r, std_r, sample_r = reference_forward(h_t, params, eps)

    assert mean.shape == (batch_size, latent_dim)
    assert std.shape == (batch_size, latent_dim)
    assert sample.shape == (batch_size, latent_dim)
    assert bool(jnp.all(std > 0.0))
    assert bool(jnp.allclose(mean, mean_r, atol=1e-2, rtol=1e-2))
    assert bool(jnp.allclose(std, std_r, atol=1e-2, rtol=1e-2))
    assert bool(jnp.allclose(sample, sample_r, atol=1e-2, rtol=1e-2))

    print("KERNEL_OK")
</pallas_src>

<mosaic_0001>
module attributes {stable_mosaic.version = 11 : i64} {
  func.func @dynamic_predictor_kernel(%arg0: i32, %arg1: memref<128x32xbf16, #tpu.memory_space<vmem>>, %arg2: memref<32x64xbf16, #tpu.memory_space<vmem>>, %arg3: memref<1x64xf32, #tpu.memory_space<vmem>>, %arg4: memref<64x64xbf16, #tpu.memory_space<vmem>>, %arg5: memref<1x64xf32, #tpu.memory_space<vmem>>, %arg6: memref<64x32xbf16, #tpu.memory_space<vmem>>, %arg7: memref<1x32xf32, #tpu.memory_space<vmem>>, %arg8: memref<32x16xbf16, #tpu.memory_space<vmem>>, %arg9: memref<1x16xf32, #tpu.memory_space<vmem>>, %arg10: memref<16x8xbf16, #tpu.memory_space<vmem>>, %arg11: memref<1x8xf32, #tpu.memory_space<vmem>>, %arg12: memref<16x8xbf16, #tpu.memory_space<vmem>>, %arg13: memref<1x8xf32, #tpu.memory_space<vmem>>, %arg14: memref<128x8xf32, #tpu.memory_space<vmem>>, %arg15: memref<128x24xf32, #tpu.memory_space<vmem>>) attributes {dimension_semantics = [#tpu.dimension_semantics<parallel>], iteration_bounds = array<i64: 2>, scalar_prefetch = 0 : i64, scratch_operands = 0 : i64, tpu.core_type = #tpu.core_type<tc>, window_params = [{transform_indices = @transform_0, window_bounds = array<i64: 128, 32>}, {pipeline_mode = #tpu.pipeline_mode<synchronous>, transform_indices = @transform_1, window_bounds = array<i64: 32, 64>}, {pipeline_mode = #tpu.pipeline_mode<synchronous>, transform_indices = @transform_2, window_bounds = array<i64: 1, 64>}, {pipeline_mode = #tpu.pipeline_mode<synchronous>, transform_indices = @transform_3, window_bounds = array<i64: 64, 64>}, {pipeline_mode = #tpu.pipeline_mode<synchronous>, transform_indices = @transform_4, window_bounds = array<i64: 1, 64>}, {pipeline_mode = #tpu.pipeline_mode<synchronous>, transform_indices = @transform_5, window_bounds = array<i64: 64, 32>}, {pipeline_mode = #tpu.pipeline_mode<synchronous>, transform_indices = @transform_6, window_bounds = array<i64: 1, 32>}, {pipeline_mode = #tpu.pipeline_mode<synchronous>, transform_indices = @transform_7, window_bounds = array<i64: 32, 16>}, {pipeline_mode = #tpu.pipeline_mode<synchronous>, transform_indices = @transform_8, window_bounds = array<i64: 1, 16>}, {pipeline_mode = #tpu.pipeline_mode<synchronous>, transform_indices = @transform_9, window_bounds = array<i64: 16, 8>}, {pipeline_mode = #tpu.pipeline_mode<synchronous>, transform_indices = @transform_10, window_bounds = array<i64: 1, 8>}, {pipeline_mode = #tpu.pipeline_mode<synchronous>, transform_indices = @transform_11, window_bounds = array<i64: 16, 8>}, {pipeline_mode = #tpu.pipeline_mode<synchronous>, transform_indices = @transform_12, window_bounds = array<i64: 1, 8>}, {transform_indices = @transform_13, window_bounds = array<i64: 128, 8>}, {transform_indices = @transform_14, window_bounds = array<i64: 128, 24>}]} {
    %c0 = arith.constant 0 : index
    %c0_0 = arith.constant 0 : index
    %0 = vector.load %arg1[%c0, %c0_0] : memref<128x32xbf16, #tpu.memory_space<vmem>>, vector<128x32xbf16>
    %c0_1 = arith.constant 0 : index
    %c0_2 = arith.constant 0 : index
    %1 = vector.load %arg2[%c0_1, %c0_2] : memref<32x64xbf16, #tpu.memory_space<vmem>>, vector<32x64xbf16>
    %cst = arith.constant dense<0.000000e+00> : vector<128x64xf32>
    %2 = tpu.matmul %0, %1, %cst {dimension_numbers = #tpu.dot_dimension_numbers<[1], [0], [0], [1], [0, 0, 1, 1], [], []>} : vector<128x32xbf16>, vector<32x64xbf16>, vector<128x64xf32> -> vector<128x64xf32>
    %c0_3 = arith.constant 0 : index
    %c0_4 = arith.constant 0 : index
    %3 = vector.load %arg3[%c0_3, %c0_4] : memref<1x64xf32, #tpu.memory_space<vmem>>, vector<1x64xf32>
    %4 = vector.broadcast %3 : vector<1x64xf32> to vector<128x64xf32>
    %5 = arith.addf %2, %4 : vector<128x64xf32>
    %cst_5 = arith.constant 0.000000e+00 : f32
    %6 = vector.broadcast %cst_5 : f32 to vector<128x64xf32>
    %7 = arith.maximumf %5, %6 : vector<128x64xf32>
    %8 = arith.truncf %7 : vector<128x64xf32> to vector<128x64xbf16>
    %c0_6 = arith.constant 0 : index
    %c0_7 = arith.constant 0 : index
    %9 = vector.load %arg4[%c0_6, %c0_7] : memref<64x64xbf16, #tpu.memory_space<vmem>>, vector<64x64xbf16>
    %cst_8 = arith.constant dense<0.000000e+00> : vector<128x64xf32>
    %10 = tpu.matmul %8, %9, %cst_8 {dimension_numbers = #tpu.dot_dimension_numbers<[1], [0], [0], [1], [0, 0, 1, 1], [], []>} : vector<128x64xbf16>, vector<64x64xbf16>, vector<128x64xf32> -> vector<128x64xf32>
    %c0_9 = arith.constant 0 : index
    %c0_10 = arith.constant 0 : index
    %11 = vector.load %arg5[%c0_9, %c0_10] : memref<1x64xf32, #tpu.memory_space<vmem>>, vector<1x64xf32>
    %12 = vector.broadcast %11 : vector<1x64xf32> to vector<128x64xf32>
    %13 = arith.addf %10, %12 : vector<128x64xf32>
    %cst_11 = arith.constant 0.000000e+00 : f32
    %14 = vector.broadcast %cst_11 : f32 to vector<128x64xf32>
    %15 = arith.maximumf %13, %14 : vector<128x64xf32>
    %16 = arith.truncf %15 : vector<128x64xf32> to vector<128x64xbf16>
    %c0_12 = arith.constant 0 : index
    %c0_13 = arith.constant 0 : index
    %17 = vector.load %arg6[%c0_12, %c0_13] : memref<64x32xbf16, #tpu.memory_space<vmem>>, vector<64x32xbf16>
    %cst_14 = arith.constant dense<0.000000e+00> : vector<128x32xf32>
    %18 = tpu.matmul %16, %17, %cst_14 {dimension_numbers = #tpu.dot_dimension_numbers<[1], [0], [0], [1], [0, 0, 1, 1], [], []>} : vector<128x64xbf16>, vector<64x32xbf16>, vector<128x32xf32> -> vector<128x32xf32>
    %c0_15 = arith.constant 0 : index
    %c0_16 = arith.constant 0 : index
    %19 = vector.load %arg7[%c0_15, %c0_16] : memref<1x32xf32, #tpu.memory_space<vmem>>, vector<1x32xf32>
    %20 = vector.broadcast %19 : vector<1x32xf32> to vector<128x32xf32>
    %21 = arith.addf %18, %20 : vector<128x32xf32>
    %cst_17 = arith.constant 0.000000e+00 : f32
    %22 = vector.broadcast %cst_17 : f32 to vector<128x32xf32>
    %23 = arith.maximumf %21, %22 : vector<128x32xf32>
    %24 = arith.truncf %23 : vector<128x32xf32> to vector<128x32xbf16>
    %c0_18 = arith.constant 0 : index
    %c0_19 = arith.constant 0 : index
    %25 = vector.load %arg8[%c0_18, %c0_19] : memref<32x16xbf16, #tpu.memory_space<vmem>>, vector<32x16xbf16>
    %cst_20 = arith.constant dense<0.000000e+00> : vector<128x16xf32>
    %26 = tpu.matmul %24, %25, %cst_20 {dimension_numbers = #tpu.dot_dimension_numbers<[1], [0], [0], [1], [0, 0, 1, 1], [], []>} : vector<128x32xbf16>, vector<32x16xbf16>, vector<128x16xf32> -> vector<128x16xf32>
    %c0_21 = arith.constant 0 : index
    %c0_22 = arith.constant 0 : index
    %27 = vector.load %arg9[%c0_21, %c0_22] : memref<1x16xf32, #tpu.memory_space<vmem>>, vector<1x16xf32>
    %28 = vector.broadcast %27 : vector<1x16xf32> to vector<128x16xf32>
    %29 = arith.addf %26, %28 : vector<128x16xf32>
    %cst_23 = arith.constant 0.000000e+00 : f32
    %30 = vector.broadcast %cst_23 : f32 to vector<128x16xf32>
    %31 = arith.maximumf %29, %30 : vector<128x16xf32>
    %32 = arith.truncf %31 : vector<128x16xf32> to vector<128x16xbf16>
    %c0_24 = arith.constant 0 : index
    %c0_25 = arith.constant 0 : index
    %33 = vector.load %arg10[%c0_24, %c0_25] : memref<16x8xbf16, #tpu.memory_space<vmem>>, vector<16x8xbf16>
    %cst_26 = arith.constant dense<0.000000e+00> : vector<128x8xf32>
    %34 = tpu.matmul %32, %33, %cst_26 {dimension_numbers = #tpu.dot_dimension_numbers<[1], [0], [0], [1], [0, 0, 1, 1], [], []>} : vector<128x16xbf16>, vector<16x8xbf16>, vector<128x8xf32> -> vector<128x8xf32>
    %c0_27 = arith.constant 0 : index
    %c0_28 = arith.constant 0 : index
    %35 = vector.load %arg11[%c0_27, %c0_28] : memref<1x8xf32, #tpu.memory_space<vmem>>, vector<1x8xf32>
    %36 = vector.broadcast %35 : vector<1x8xf32> to vector<128x8xf32>
    %37 = arith.addf %34, %36 : vector<128x8xf32>
    %c0_29 = arith.constant 0 : index
    %c0_30 = arith.constant 0 : index
    %38 = vector.load %arg12[%c0_29, %c0_30] : memref<16x8xbf16, #tpu.memory_space<vmem>>, vector<16x8xbf16>
    %cst_31 = arith.constant dense<0.000000e+00> : vector<128x8xf32>
    %39 = tpu.matmul %32, %38, %cst_31 {dimension_numbers = #tpu.dot_dimension_numbers<[1], [0], [0], [1], [0, 0, 1, 1], [], []>} : vector<128x16xbf16>, vector<16x8xbf16>, vector<128x8xf32> -> vector<128x8xf32>
    %c0_32 = arith.constant 0 : index
    %c0_33 = arith.constant 0 : index
    %40 = vector.load %arg13[%c0_32, %c0_33] : memref<1x8xf32, #tpu.memory_space<vmem>>, vector<1x8xf32>
    %41 = vector.broadcast %40 : vector<1x8xf32> to vector<128x8xf32>
    %42 = arith.addf %39, %41 : vector<128x8xf32>
    %cst_34 = arith.constant 0.000000e+00 : f32
    %43 = vector.broadcast %cst_34 : f32 to vector<128x8xf32>
    %44 = arith.maximumf %42, %43 : vector<128x8xf32>
    %45 = math.absf %42 : vector<128x8xf32>
    %cst_35 = arith.constant 0.000000e+00 : f32
    %46 = vector.broadcast %cst_35 : f32 to vector<128x8xf32>
    %47 = arith.subf %46, %45 : vector<128x8xf32>
    %48 = math.exp %47 : vector<128x8xf32>
    %49 = math.log1p %48 : vector<128x8xf32>
    %50 = arith.addf %44, %49 : vector<128x8xf32>
    %cst_36 = arith.constant 9.99999997E-7 : f32
    %51 = vector.broadcast %cst_36 : f32 to vector<128x8xf32>
    %52 = arith.addf %50, %51 : vector<128x8xf32>
    %c0_37 = arith.constant 0 : index
    %c0_38 = arith.constant 0 : index
    %53 = vector.load %arg14[%c0_37, %c0_38] : memref<128x8xf32, #tpu.memory_space<vmem>>, vector<128x8xf32>
    %54 = arith.mulf %52, %53 : vector<128x8xf32>
    %55 = arith.addf %37, %54 : vector<128x8xf32>
    %56 = tpu.concatenate %37, %52, %55 in 1 : vector<128x8xf32>, vector<128x8xf32>, vector<128x8xf32> -> vector<128x24xf32>
    %c0_39 = arith.constant 0 : index
    %c0_40 = arith.constant 0 : index
    %57 = vector.load %arg15[%c0_39, %c0_40] : memref<128x24xf32, #tpu.memory_space<vmem>>, vector<128x24xf32>
    tpu.vector_store %arg15[%c0_39, %c0_40], %56 {strides = array<i32>} : memref<128x24xf32, #tpu.memory_space<vmem>>, vector<128x24xf32>,
    return
  }
  func.func @transform_0(%arg0: i32) -> (i32, i32) {
    %c0_i32 = arith.constant 0 : i32
    %c0_i32_0 = arith.constant 0 : i32
    return %arg0, %c0_i32 : i32, i32
  }
  func.func @transform_1(%arg0: i32) -> (i32, i32) {
    %c0_i32 = arith.constant 0 : i32
    %c0_i32_0 = arith.constant 0 : i32
    %c0_i32_1 = arith.constant 0 : i32
    return %c0_i32, %c0_i32_0 : i32, i32
  }
  func.func @transform_2(%arg0: i32) -> (i32, i32) {
    %c0_i32 = arith.constant 0 : i32
    %c0_i32_0 = arith.constant 0 : i32
    %c0_i32_1 = arith.constant 0 : i32
    return %c0_i32, %c0_i32_0 : i32, i32
  }
  func.func @transform_3(%arg0: i32) -> (i32, i32) {
    %c0_i32 = arith.constant 0 : i32
    %c0_i32_0 = arith.constant 0 : i32
    %c0_i32_1 = arith.constant 0 : i32
    return %c0_i32, %c0_i32_0 : i32, i32
  }
  func.func @transform_4(%arg0: i32) -> (i32, i32) {
    %c0_i32 = arith.constant 0 : i32
    %c0_i32_0 = arith.constant 0 : i32
    %c0_i32_1 = arith.constant 0 : i32
    return %c0_i32, %c0_i32_0 : i32, i32
  }
  func.func @transform_5(%arg0: i32) -> (i32, i32) {
    %c0_i32 = arith.constant 0 : i32
    %c0_i32_0 = arith.constant 0 : i32
    %c0_i32_1 = arith.constant 0 : i32
    return %c0_i32, %c0_i32_0 : i32, i32
  }
  func.func @transform_6(%arg0: i32) -> (i32, i32) {
    %c0_i32 = arith.constant 0 : i32
    %c0_i32_0 = arith.constant 0 : i32
    %c0_i32_1 = arith.constant 0 : i32
    return %c0_i32, %c0_i32_0 : i32, i32
  }
  func.func @transform_7(%arg0: i32) -> (i32, i32) {
    %c0_i32 = arith.constant 0 : i32
    %c0_i32_0 = arith.constant 0 : i32
    %c0_i32_1 = arith.constant 0 : i32
    return %c0_i32, %c0_i32_0 : i32, i32
  }
  func.func @transform_8(%arg0: i32) -> (i32, i32) {
    %c0_i32 = arith.constant 0 : i32
    %c0_i32_0 = arith.constant 0 : i32
    %c0_i32_1 = arith.constant 0 : i32
    return %c0_i32, %c0_i32_0 : i32, i32
  }
  func.func @transform_9(%arg0: i32) -> (i32, i32) {
    %c0_i32 = arith.constant 0 : i32
    %c0_i32_0 = arith.constant 0 : i32
    %c0_i32_1 = arith.constant 0 : i32
    return %c0_i32, %c0_i32_0 : i32, i32
  }
  func.func @transform_10(%arg0: i32) -> (i32, i32) {
    %c0_i32 = arith.constant 0 : i32
    %c0_i32_0 = arith.constant 0 : i32
    %c0_i32_1 = arith.constant 0 : i32
    return %c0_i32, %c0_i32_0 : i32, i32
  }
  func.func @transform_11(%arg0: i32) -> (i32, i32) {
    %c0_i32 = arith.constant 0 : i32
    %c0_i32_0 = arith.constant 0 : i32
    %c0_i32_1 = arith.constant 0 : i32
    return %c0_i32, %c0_i32_0 : i32, i32
  }
  func.func @transform_12(%arg0: i32) -> (i32, i32) {
    %c0_i32 = arith.constant 0 : i32
    %c0_i32_0 = arith.constant 0 : i32
    %c0_i32_1 = arith.constant 0 : i32
    return %c0_i32, %c0_i32_0 : i32, i32
  }
  func.func @transform_13(%arg0: i32) -> (i32, i32) {
    %c0_i32 = arith.constant 0 : i32
    %c0_i32_0 = arith.constant 0 : i32
    return %arg0, %c0_i32 : i32, i32
  }
  func.func @transform_14(%arg0: i32) -> (i32, i32) {
    %c0_i32 = arith.constant 0 : i32
    %c0_i32_0 = arith.constant 0 : i32
    return %arg0, %c0_i32 : i32, i32
  }
}

</mosaic_0001>

<llo_original>
// kernel: tpu_custom_call.1
$region0: #{tpu_custom_call.1}
  #allocation0 [shape = 'u32[]', space=smem, size = 0x4, offset = 0x4, fixed_abs, tag = 'smem constant byte address 0x4 - core index']
  #allocation1 [shape = 'u32[144,128]{1,0:T(1,128)}', space=vmem, size = 0x12000, scoped, tag = 'internal scratch']
  %s0 = inlined_call_operand.vmem [shape: bf16[256,32], index: 0, kind: input, shape index: {}]
  %s1 = inlined_call_operand.vmem [shape: bf16[32,64], index: 1, kind: input, shape index: {}]
  %s2 = inlined_call_operand.vmem [shape: f32[1,64], index: 2, kind: input, shape index: {}]
  %s3 = inlined_call_operand.vmem [shape: bf16[64,64], index: 3, kind: input, shape index: {}]
  %s4 = inlined_call_operand.vmem [shape: f32[1,64], index: 4, kind: input, shape index: {}]
  %s5 = inlined_call_operand.vmem [shape: bf16[64,32], index: 5, kind: input, shape index: {}]
  %s6 = inlined_call_operand.vmem [shape: f32[1,32], index: 6, kind: input, shape index: {}]
  %s7 = inlined_call_operand.vmem [shape: bf16[32,16], index: 7, kind: input, shape index: {}]
  %s8 = inlined_call_operand.vmem [shape: f32[1,16], index: 8, kind: input, shape index: {}]
  %s9 = inlined_call_operand.vmem [shape: bf16[16,8], index: 9, kind: input, shape index: {}]
  %s10 = inlined_call_operand.vmem [shape: f32[1,8], index: 10, kind: input, shape index: {}]
  %s11 = inlined_call_operand.vmem [shape: bf16[16,8], index: 11, kind: input, shape index: {}]
  %s12 = inlined_call_operand.vmem [shape: f32[1,8], index: 12, kind: input, shape index: {}]
  %s13 = inlined_call_operand.vmem [shape: f32[256,8], index: 13, kind: input, shape index: {}]
  %s14 = inlined_call_operand.vmem [shape: f32[256,24], index: 14, kind: output, shape index: {}]
  %s15 = sld [smem:[#allocation0]]
  $region89: #{tpu_custom_call.1} parent=0
    _
  %s17 = ssub.s32 1, %s15
  %s18 = scalar_select 0, %s17, %s15
  loop: start=0, step=1, limit=4
  $region2: #{tpu_custom_call.1} parent=0 // loop_pre_header
    _
  $region3: #{tpu_custom_call.1} parent=0 // loop_header
    %s20 = sphi 0, %s24
    %p21 = scmp.ge.s32.totalorder %s20, 4
    %s30 = sphi 0, %s32
    %s33 = sphi 0, %s30
    %s34 = sphi 0, %s33
    %s50 = sphi 0, %s34
    %s54 = sphi 0, %s54
    %s56 = sphi 0, %s54
    %s57 = sphi 0, %s56
    %s71 = sphi 0, %s57
    %s75 = sphi 0, %s75
    %s77 = sphi 0, %s75
    %s78 = sphi 0, %s77
    %s92 = sphi 0, %s78
    %s96 = sphi 0, %s96
    %s98 = sphi 0, %s96
    %s99 = sphi 0, %s98
    %s113 = sphi 0, %s99
    %s117 = sphi 0, %s117
    %s119 = sphi 0, %s117
    %s120 = sphi 0, %s119
    %s134 = sphi 0, %s120
    %s138 = sphi 0, %s138
    %s140 = sphi 0, %s138
    %s141 = sphi 0, %s140
    %s155 = sphi 0, %s141
    %s159 = sphi 0, %s159
    %s161 = sphi 0, %s159
    %s162 = sphi 0, %s161
    %s176 = sphi 0, %s162
    %s180 = sphi 0, %s180
    %s182 = sphi 0, %s180
    %s183 = sphi 0, %s182
    %s197 = sphi 0, %s183
    %s201 = sphi 0, %s201
    %s203 = sphi 0, %s201
    %s204 = sphi 0, %s203
    %s218 = sphi 0, %s204
    %s222 = sphi 0, %s222
    %s224 = sphi 0, %s222
    %s225 = sphi 0, %s224
    %s239 = sphi 0, %s225
    %s243 = sphi 0, %s243
    %s245 = sphi 0, %s243
    %s246 = sphi 0, %s245
    %s260 = sphi 0, %s246
    %s264 = sphi 0, %s264
    %s266 = sphi 0, %s264
    %s267 = sphi 0, %s266
    %s281 = sphi 0, %s267
    %s285 = sphi 0, %s285
    %s287 = sphi 0, %s285
    %s288 = sphi 0, %s287
    %s302 = sphi 0, %s288
    %s308 = sphi 0, %s310
    %s311 = sphi 0, %s308
    %s312 = sphi 0, %s311
    %s328 = sphi 0, %s312
    %s334 = sphi 0, %s336
    %s337 = sphi 0, %s334
    %s338 = sphi 0, %s337
    %s354 = sphi 0, %s338
  $region4: #{tpu_custom_call.1} parent=0 // loop_header_branch
    %23 = sbr.rel (%p21) target = $region8
  $region5: #{tpu_custom_call.1} parent=0 // loop_body
    %s25 = ssub.s32 %s20, 1
    %s26 = ssub.s32 %s20, 2
    %s27 = sadd.s32 %s20, 1
    %s28 = ssub.s32 %s20, %s27
    %p29 = scmp.eq.s32.totalorder %s28, 0
    %s31 = sadd.s32 %s30, 1
    %s32 = scalar_select %p29, %s30, %s31
    %p35 = pneg %p29
    %p36 = scmp.eq.s32.totalorder %s20, 1
    %p37 = por %p35, %p36
    %p38 = scmp.ne.s32.totalorder %s30, %s33
    %p39 = scmp.eq.s32.totalorder %s20, 0
    %p40 = por %p38, %p39
    %p41 = scmp.ne.s32.totalorder %s30, %s33
    %p42 = scmp.eq.s32.totalorder %s25, 1
    %p43 = por %p41, %p42
    %p44 = scmp.ne.s32.totalorder %s33, %s34
    %p45 = scmp.eq.s32.totalorder %s25, 0
    %p46 = por %p44, %p45
    %p47 = scmp.ne.s32.totalorder %s33, %s34
    %p48 = scmp.eq.s32.totalorder %s26, 1
    %p49 = por %p47, %p48
    %p51 = scmp.ne.s32.totalorder %s34, %s50
    %p52 = scmp.eq.s32.totalorder %s26, 0
    %p53 = por %p51, %p52
    %s55 = sadd.s32 %s54, 1
    %p58 = scmp.eq.s32.totalorder %s20, 1
    %p59 = scmp.ne.s32.totalorder %s54, %s56
    %p60 = scmp.eq.s32.totalorder %s20, 0
    %p61 = por %p59, %p60
    %p62 = scmp.ne.s32.totalorder %s54, %s56
    %p63 = scmp.eq.s32.totalorder %s25, 1
    %p64 = por %p62, %p63
    %p65 = scmp.ne.s32.totalorder %s56, %s57
    %p66 = scmp.eq.s32.totalorder %s25, 0
    %p67 = por %p65, %p66
    %p68 = scmp.ne.s32.totalorder %s56, %s57
    %p69 = scmp.eq.s32.totalorder %s26, 1
    %p70 = por %p68, %p69
    %p72 = scmp.ne.s32.totalorder %s57, %s71
    %p73 = scmp.eq.s32.totalorder %s26, 0
    %p74 = por %p72, %p73
    %s76 = sadd.s32 %s75, 1
    %p79 = scmp.eq.s32.totalorder %s20, 1
    %p80 = scmp.ne.s32.totalorder %s75, %s77
    %p81 = scmp.eq.s32.totalorder %s20, 0
    %p82 = por %p80, %p81
    %p83 = scmp.ne.s32.totalorder %s75, %s77
    %p84 = scmp.eq.s32.totalorder %s25, 1
    %p85 = por %p83, %p84
    %p86 = scmp.ne.s32.totalorder %s77, %s78
    %p87 = scmp.eq.s32.totalorder %s25, 0
    %p88 = por %p86, %p87
    %p89 = scmp.ne.s32.totalorder %s77, %s78
    %p90 = scmp.eq.s32.totalorder %s26, 1
    %p91 = por %p89, %p90
    %p93 = scmp.ne.s32.totalorder %s78, %s92
    %p94 = scmp.eq.s32.totalorder %s26, 0
    %p95 = por %p93, %p94
    %s97 = sadd.s32 %s96, 1
    %p100 = scmp.eq.s32.totalorder %s20, 1
    %p101 = scmp.ne.s32.totalorder %s96, %s98
    %p102 = scmp.eq.s32.totalorder %s20, 0
    %p103 = por %p101, %p102
    %p104 = scmp.ne.s32.totalorder %s96, %s98
    %p105 = scmp.eq.s32.totalorder %s25, 1
    %p106 = por %p104, %p105
    %p107 = scmp.ne.s32.totalorder %s98, %s99
    %p108 = scmp.eq.s32.totalorder %s25, 0
    %p109 = por %p107, %p108
    %p110 = scmp.ne.s32.totalorder %s98, %s99
    %p111 = scmp.eq.s32.totalorder %s26, 1
    %p112 = por %p110, %p111
    %p114 = scmp.ne.s32.totalorder %s99, %s113
    %p115 = scmp.eq.s32.totalorder %s26, 0
    %p116 = por %p114, %p115
    %s118 = sadd.s32 %s117, 1
    %p121 = scmp.eq.s32.totalorder %s20, 1
    %p122 = scmp.ne.s32.totalorder %s117, %s119
    %p123 = scmp.eq.s32.totalorder %s20, 0
    %p124 = por %p122, %p123
    %p125 = scmp.ne.s32.totalorder %s117, %s119
    %p126 = scmp.eq.s32.totalorder %s25, 1
    %p127 = por %p125, %p126
    %p128 = scmp.ne.s32.totalorder %s119, %s120
    %p129 = scmp.eq.s32.totalorder %s25, 0
    %p130 = por %p128, %p129
    %p131 = scmp.ne.s32.totalorder %s119, %s120
    %p132 = scmp.eq.s32.totalorder %s26, 1
    %p133 = por %p131, %p132
    %p135 = scmp.ne.s32.totalorder %s120, %s134
    %p136 = scmp.eq.s32.totalorder %s26, 0
    %p137 = por %p135, %p136
    %s139 = sadd.s32 %s138, 1
    %p142 = scmp.eq.s32.totalorder %s20, 1
    %p143 = scmp.ne.s32.totalorder %s138, %s140
    %p144 = scmp.eq.s32.totalorder %s20, 0
    %p145 = por %p143, %p144
    %p146 = scmp.ne.s32.totalorder %s138, %s140
    %p147 = scmp.eq.s32.totalorder %s25, 1
    %p148 = por %p146, %p147
    %p149 = scmp.ne.s32.totalorder %s140, %s141
    %p150 = scmp.eq.s32.totalorder %s25, 0
    %p151 = por %p149, %p150
    %p152 = scmp.ne.s32.totalorder %s140, %s141
    %p153 = scmp.eq.s32.totalorder %s26, 1
    %p154 = por %p152, %p153
    %p156 = scmp.ne.s32.totalorder %s141, %s155
    %p157 = scmp.eq.s32.totalorder %s26, 0
    %p158 = por %p156, %p157
    %s160 = sadd.s32 %s159, 1
    %p163 = scmp.eq.s32.totalorder %s20, 1
    %p164 = scmp.ne.s32.totalorder %s159, %s161
    %p165 = scmp.eq.s32.totalorder %s20, 0
    %p166 = por %p164, %p165
    %p167 = scmp.ne.s32.totalorder %s159, %s161
    %p168 = scmp.eq.s32.totalorder %s25, 1
    %p169 = por %p167, %p168
    %p170 = scmp.ne.s32.totalorder %s161, %s162
    %p171 = scmp.eq.s32.totalorder %s25, 0
    %p172 = por %p170, %p171
    %p173 = scmp.ne.s32.totalorder %s161, %s162
    %p174 = scmp.eq.s32.totalorder %s26, 1
    %p175 = por %p173, %p174
    %p177 = scmp.ne.s32.totalorder %s162, %s176
    %p178 = scmp.eq.s32.totalorder %s26, 0
    %p179 = por %p177, %p178
    %s181 = sadd.s32 %s180, 1
    %p184 = scmp.eq.s32.totalorder %s20, 1
    %p185 = scmp.ne.s32.totalorder %s180, %s182
    %p186 = scmp.eq.s32.totalorder %s20, 0
    %p187 = por %p185, %p186
    %p188 = scmp.ne.s32.totalorder %s180, %s182
    %p189 = scmp.eq.s32.totalorder %s25, 1
    %p190 = por %p188, %p189
    %p191 = scmp.ne.s32.totalorder %s182, %s183
    %p192 = scmp.eq.s32.totalorder %s25, 0
    %p193 = por %p191, %p192
    %p194 = scmp.ne.s32.totalorder %s182, %s183
    %p195 = scmp.eq.s32.totalorder %s26, 1
    %p196 = por %p194, %p195
    %p198 = scmp.ne.s32.totalorder %s183, %s197
    %p199 = scmp.eq.s32.totalorder %s26, 0
    %p200 = por %p198, %p199
    %s202 = sadd.s32 %s201, 1
    %p205 = scmp.eq.s32.totalorder %s20, 1
    %p206 = scmp.ne.s32.totalorder %s201, %s203
    %p207 = scmp.eq.s32.totalorder %s20, 0
    %p208 = por %p206, %p207
    %p209 = scmp.ne.s32.totalorder %s201, %s203
    %p210 = scmp.eq.s32.totalorder %s25, 1
    %p211 = por %p209, %p210
    %p212 = scmp.ne.s32.totalorder %s203, %s204
    %p213 = scmp.eq.s32.totalorder %s25, 0
    %p214 = por %p212, %p213
    %p215 = scmp.ne.s32.totalorder %s203, %s204
    %p216 = scmp.eq.s32.totalorder %s26, 1
    %p217 = por %p215, %p216
    %p219 = scmp.ne.s32.totalorder %s204, %s218
    %p220 = scmp.eq.s32.totalorder %s26, 0
    %p221 = por %p219, %p220
    %s223 = sadd.s32 %s222, 1
    %p226 = scmp.eq.s32.totalorder %s20, 1
    %p227 = scmp.ne.s32.totalorder %s222, %s224
    %p228 = scmp.eq.s32.totalorder %s20, 0
    %p229 = por %p227, %p228
    %p230 = scmp.ne.s32.totalorder %s222, %s224
    %p231 = scmp.eq.s32.totalorder %s25, 1
    %p232 = por %p230, %p231
    %p233 = scmp.ne.s32.totalorder %s224, %s225
    %p234 = scmp.eq.s32.totalorder %s25, 0
    %p235 = por %p233, %p234
    %p236 = scmp.ne.s32.totalorder %s224, %s225
    %p237 = scmp.eq.s32.totalorder %s26, 1
    %p238 = por %p236, %p237
    %p240 = scmp.ne.s32.totalorder %s225, %s239
    %p241 = scmp.eq.s32.totalorder %s26, 0
    %p242 = por %p240, %p241
    %s244 = sadd.s32 %s243, 1
    %p247 = scmp.eq.s32.totalorder %s20, 1
    %p248 = scmp.ne.s32.totalorder %s243, %s245
    %p249 = scmp.eq.s32.totalorder %s20, 0
    %p250 = por %p248, %p249
    %p251 = scmp.ne.s32.totalorder %s243, %s245
    %p252 = scmp.eq.s32.totalorder %s25, 1
    %p253 = por %p251, %p252
    %p254 = scmp.ne.s32.totalorder %s245, %s246
    %p255 = scmp.eq.s32.totalorder %s25, 0
    %p256 = por %p254, %p255
    %p257 = scmp.ne.s32.totalorder %s245, %s246
    %p258 = scmp.eq.s32.totalorder %s26, 1
    %p259 = por %p257, %p258
    %p261 = scmp.ne.s32.totalorder %s246, %s260
    %p262 = scmp.eq.s32.totalorder %s26, 0
    %p263 = por %p261, %p262
    %s265 = sadd.s32 %s264, 1
    %p268 = scmp.eq.s32.totalorder %s20, 1
    %p269 = scmp.ne.s32.totalorder %s264, %s266
    %p270 = scmp.eq.s32.totalorder %s20, 0
    %p271 = por %p269, %p270
    %p272 = scmp.ne.s32.totalorder %s264, %s266
    %p273 = scmp.eq.s32.totalorder %s25, 1
    %p274 = por %p272, %p273
    %p275 = scmp.ne.s32.totalorder %s266, %s267
    %p276 = scmp.eq.s32.totalorder %s25, 0
    %p277 = por %p275, %p276
    %p278 = scmp.ne.s32.totalorder %s266, %s267
    %p279 = scmp.eq.s32.totalorder %s26, 1
    %p280 = por %p278, %p279
    %p282 = scmp.ne.s32.totalorder %s267, %s281
    %p283 = scmp.eq.s32.totalorder %s26, 0
    %p284 = por %p282, %p283
    %s286 = sadd.s32 %s285, 1
    %p289 = scmp.eq.s32.totalorder %s20, 1
    %p290 = scmp.ne.s32.totalorder %s285, %s287
    %p291 = scmp.eq.s32.totalorder %s20, 0
    %p292 = por %p290, %p291
    %p293 = scmp.ne.s32.totalorder %s285, %s287
    %p294 = scmp.eq.s32.totalorder %s25, 1
    %p295 = por %p293, %p294
    %p296 = scmp.ne.s32.totalorder %s287, %s288
    %p297 = scmp.eq.s32.totalorder %s25, 0
    %p298 = por %p296, %p297
    %p299 = scmp.ne.s32.totalorder %s287, %s288
    %p300 = scmp.eq.s32.totalorder %s26, 1
    %p301 = por %p299, %p300
    %p303 = scmp.ne.s32.totalorder %s288, %s302
    %p304 = scmp.eq.s32.totalorder %s26, 0
    %p305 = por %p303, %p304
    %s306 = ssub.s32 %s20, %s27
    %p307 = scmp.eq.s32.totalorder %s306, 0
    %s309 = sadd.s32 %s308, 1
    %s310 = scalar_select %p307, %s308, %s309
    %p313 = pneg %p307
    %p314 = scmp.eq.s32.totalorder %s20, 1
    %p315 = por %p313, %p314
    %p316 = scmp.ne.s32.totalorder %s308, %s311
    %p317 = scmp.eq.s32.totalorder %s20, 0
    %p318 = por %p316, %p317
    %p319 = scmp.ne.s32.totalorder %s308, %s311
    %p320 = scmp.eq.s32.totalorder %s25, 1
    %p321 = por %p319, %p320
    %p322 = scmp.ne.s32.totalorder %s311, %s312
    %p323 = scmp.eq.s32.totalorder %s25, 0
    %p324 = por %p322, %p323
    %p325 = scmp.ne.s32.totalorder %s311, %s312
    %p326 = scmp.eq.s32.totalorder %s26, 1
    %p327 = por %p325, %p326
    %p329 = scmp.ne.s32.totalorder %s312, %s328
    %p330 = scmp.eq.s32.totalorder %s26, 0
    %p331 = por %p329, %p330
    %s332 = ssub.s32 %s20, %s27
    %p333 = scmp.eq.s32.totalorder %s332, 0
    %s335 = sadd.s32 %s334, 1
    %s336 = scalar_select %p333, %s334, %s335
    %p339 = pneg %p333
    %p340 = scmp.eq.s32.totalorder %s20, 1
    %p341 = por %p339, %p340
    %p342 = scmp.ne.s32.totalorder %s334, %s337
    %p343 = scmp.eq.s32.totalorder %s20, 0
    %p344 = por %p342, %p343
    %p345 = scmp.ne.s32.totalorder %s334, %s337
    %p346 = scmp.eq.s32.totalorder %s25, 1
    %p347 = por %p345, %p346
    %p348 = scmp.ne.s32.totalorder %s337, %s338
    %p349 = scmp.eq.s32.totalorder %s25, 0
    %p350 = por %p348, %p349
    %p351 = scmp.ne.s32.totalorder %s337, %s338
    %p352 = scmp.eq.s32.totalorder %s26, 1
    %p353 = por %p351, %p352
    %p355 = scmp.ne.s32.totalorder %s338, %s354
    %p356 = scmp.eq.s32.totalorder %s26, 0
    %p357 = por %p355, %p356
    %p358 = scmp.le.s32.totalorder 1, %s20
    %p359 = scmp.lt.s32.totalorder %s20, 3
    %p360 = pnand %p358, %p359
    %p361 = pneg %p360
    // Predicated region
    $region9: #{tpu_custom_call.1} parent=5 // pred_check
      _
    $region10: #{tpu_custom_call.1} parent=5 // pred_check_branch
      %363 = sbr.rel (%p360) target = $region12
    $region11: #{tpu_custom_call.1} parent=5 // pred_region
      %s364 = ssub.s32 %s20, 1
      // Predicated region
      $region13: #{tpu_custom_call.1} parent=11 // pred_check
        %p365 = pneg %p67
      $region14: #{tpu_custom_call.1} parent=11 // pred_check_branch
        %367 = sbr.rel (%p365) target = $region16
      $region15: #{tpu_custom_call.1} parent=11 // pred_region
        _
      $region16: #{tpu_custom_call.1} parent=11 // pred_fallthru
        _
      // Predicated region
      $region17: #{tpu_custom_call.1} parent=11 // pred_check
        %p368 = pneg %p88
      $region18: #{tpu_custom_call.1} parent=11 // pred_check_branch
        %370 = sbr.rel (%p368) target = $region20
      $region19: #{tpu_custom_call.1} parent=11 // pred_region
        _
      $region20: #{tpu_custom_call.1} parent=11 // pred_fallthru
        _
      // Predicated region
      $region21: #{tpu_custom_call.1} parent=11 // pred_check
        %p371 = pneg %p109
      $region22: #{tpu_custom_call.1} parent=11 // pred_check_branch
        %373 = sbr.rel (%p371) target = $region24
      $region23: #{tpu_custom_call.1} parent=11 // pred_region
        _
      $region24: #{tpu_custom_call.1} parent=11 // pred_fallthru
        _
      // Predicated region
      $region25: #{tpu_custom_call.1} parent=11 // pred_check
        %p374 = pneg %p130
      $region26: #{tpu_custom_call.1} parent=11 // pred_check_branch
        %376 = sbr.rel (%p374) target = $region28
      $region27: #{tpu_custom_call.1} parent=11 // pred_region
        _
      $region28: #{tpu_custom_call.1} parent=11 // pred_fallthru
        _
      // Predicated region
      $region29: #{tpu_custom_call.1} parent=11 // pred_check
        %p377 = pneg %p151
      $region30: #{tpu_custom_call.1} parent=11 // pred_check_branch
        %379 = sbr.rel (%p377) target = $region32
      $region31: #{tpu_custom_call.1} parent=11 // pred_region
        _
      $region32: #{tpu_custom_call.1} parent=11 // pred_fallthru
        _
      // Predicated region
      $region33: #{tpu_custom_call.1} parent=11 // pred_check
        %p380 = pneg %p172
      $region34: #{tpu_custom_call.1} parent=11 // pred_check_branch
        %382 = sbr.rel (%p380) target = $region36
      $region35: #{tpu_custom_call.1} parent=11 // pred_region
        _
      $region36: #{tpu_custom_call.1} parent=11 // pred_fallthru
        _
      // Predicated region
      $region37: #{tpu_custom_call.1} parent=11 // pred_check
        %p383 = pneg %p193
      $region38: #{tpu_custom_call.1} parent=11 // pred_check_branch
        %385 = sbr.rel (%p383) target = $region40
      $region39: #{tpu_custom_call.1} parent=11 // pred_region
        _
      $region40: #{tpu_custom_call.1} parent=11 // pred_fallthru
        _
      // Predicated region
      $region41: #{tpu_custom_call.1} parent=11 // pred_check
        %p386 = pneg %p214
      $region42: #{tpu_custom_call.1} parent=11 // pred_check_branch
        %388 = sbr.rel (%p386) target = $region44
      $region43: #{tpu_custom_call.1} parent=11 // pred_region
        _
      $region44: #{tpu_custom_call.1} parent=11 // pred_fallthru
        _
      // Predicated region
      $region45: #{tpu_custom_call.1} parent=11 // pred_check
        %p389 = pneg %p235
      $region46: #{tpu_custom_call.1} parent=11 // pred_check_branch
        %391 = sbr.rel (%p389) target = $region48
      $region47: #{tpu_custom_call.1} parent=11 // pred_region
        _
      $region48: #{tpu_custom_call.1} parent=11 // pred_fallthru
        _
      // Predicated region
      $region49: #{tpu_custom_call.1} parent=11 // pred_check
        %p392 = pneg %p256
      $region50: #{tpu_custom_call.1} parent=11 // pred_check_branch
        %394 = sbr.rel (%p392) target = $region52
      $region51: #{tpu_custom_call.1} parent=11 // pred_region
        _
      $region52: #{tpu_custom_call.1} parent=11 // pred_fallthru
        _
      // Predicated region
      $region53: #{tpu_custom_call.1} parent=11 // pred_check
        %p395 = pneg %p277
      $region54: #{tpu_custom_call.1} parent=11 // pred_check_branch
        %397 = sbr.rel (%p395) target = $region56
      $region55: #{tpu_custom_call.1} parent=11 // pred_region
        _
      $region56: #{tpu_custom_call.1} parent=11 // pred_fallthru
        _
      // Predicated region
      $region57: #{tpu_custom_call.1} parent=11 // pred_check
        %p398 = pneg %p298
      $region58: #{tpu_custom_call.1} parent=11 // pred_check_branch
        %400 = sbr.rel (%p398) target = $region60
      $region59: #{tpu_custom_call.1} parent=11 // pred_region
        _
      $region60: #{tpu_custom_call.1} parent=11 // pred_fallthru
        _
    $region12: #{tpu_custom_call.1} parent=5 // pred_fallthru
      _
    %p401 = scmp.lt.s32.totalorder %s20, 2
    // Predicated region
    $region61: #{tpu_custom_call.1} parent=5 // pred_check
      %p402 = pneg %p401
    $region62: #{tpu_custom_call.1} parent=5 // pred_check_branch
      %404 = sbr.rel (%p402) target = $region64
    $region63: #{tpu_custom_call.1} parent=5 // pred_region
      // Predicated region
      $region65: #{tpu_custom_call.1} parent=63 // pred_check
        %p405 = pneg %p40
      $region66: #{tpu_custom_call.1} parent=63 // pred_check_branch
        %407 = sbr.rel (%p405) target = $region68
      $region67: #{tpu_custom_call.1} parent=63 // pred_region
        %s408 = smul.u32 16, %s20
        %p409 = scmp.lt.s32.totalorder %s408, 31
        %s410 = scalar_select %p409, %s408, 31
        %s411 = smul.addr %s410, 4
        %s412 = scalar_lea.vmem %s0, %s411
        %s413 = smul.u32 16, %s20
      $region68: #{tpu_custom_call.1} parent=63 // pred_fallthru
        _
      // Predicated region
      $region69: #{tpu_custom_call.1} parent=63 // pred_check
        %p414 = pneg %p318
      $region70: #{tpu_custom_call.1} parent=63 // pred_check_branch
        %416 = sbr.rel (%p414) target = $region72
      $region71: #{tpu_custom_call.1} parent=63 // pred_region
        %s417 = smul.u32 16, %s20
        %p418 = scmp.lt.s32.totalorder %s417, 31
        %s419 = scalar_select %p418, %s417, 31
        %s420 = smul.addr %s419, 8
        %s421 = scalar_lea.vmem %s13, %s420
        %s422 = smul.u32 16, %s20
      $region72: #{tpu_custom_call.1} parent=63 // pred_fallthru
        _
    $region64: #{tpu_custom_call.1} parent=5 // pred_fallthru
      _
    %p423 = scmp.le.s32.totalorder 1, %s20
    %p424 = scmp.lt.s32.totalorder %s20, 3
    %p425 = pnand %p423, %p424
    %p426 = pneg %p425
    // Predicated region
    $region73: #{tpu_custom_call.1} parent=5 // pred_check
      _
    $region74: #{tpu_custom_call.1} parent=5 // pred_check_branch
      %428 = sbr.rel (%p425) target = $region76
    $region75: #{tpu_custom_call.1} parent=5 // pred_region
      %s429 = ssub.s32 %s20, 1
      %s430 = smul.u32 16, %s25
      %p431 = scmp.lt.s32.totalorder %s430, 31
      %s432 = scalar_select %p431, %s430, 31
      %s433 = smul.addr %s432, 4
      %s434 = scalar_lea.vmem %s0, %s433
      %p435 = pneg %p46
      %p436 = pneg %p43
      %p437 = pneg %p67
      %p438 = pneg %p64
      %p439 = pneg %p88
      %p440 = pneg %p85
      %p441 = pneg %p109
      %p442 = pneg %p106
      %p443 = pneg %p130
      %p444 = pneg %p127
      %p445 = pneg %p151
      %p446 = pneg %p148
      %p447 = pneg %p172
      %p448 = pneg %p169
      %p449 = pneg %p193
      %p450 = pneg %p190
      %p451 = pneg %p214
      %p452 = pneg %p211
      %p453 = pneg %p235
      %p454 = pneg %p232
      %p455 = pneg %p256
      %p456 = pneg %p253
      %p457 = pneg %p277
      %p458 = pneg %p274
      %p459 = pneg %p298
      %p460 = pneg %p295
      %s461 = smul.u32 16, %s25
      %p462 = scmp.lt.s32.totalorder %s461, 31
      %s463 = scalar_select %p462, %s461, 31
      %s464 = smul.addr %s463, 8
      %s465 = scalar_lea.vmem %s13, %s464
      %p466 = pneg %p324
      %p467 = pneg %p321
      %p468 = pneg %p350
      %p469 = pneg %p347
      %s470 = smul.u32 16, %s25
      %p471 = scmp.lt.s32.totalorder %s470, 31
      %s472 = scalar_select %p471, %s470, 31
      %s473 = smul.addr %s472, 8
      %s474 = scalar_lea.vmem %s14, %s473
      %s475 = smul.u32 16, %s25
      %p476 = scmp.lt.s32.totalorder %s475, 31
      %s477 = scalar_select %p476, %s475, 31
      %s478 = smul.addr %s477, 4
      %s479 = scalar_lea.vmem %s0, %s478
      %s480 = smul.u32 16, %s25
      %s481 = smul.u32 16, %s25
      %p482 = scmp.lt.s32.totalorder %s481, 31
      %s483 = scalar_select %p482, %s481, 31
      %s484 = smul.addr %s483, 8
      %s485 = scalar_lea.vmem %s13, %s484
      %s486 = smul.u32 16, %s25
      %s487 = smul.u32 16, %s25
      %p488 = scmp.lt.s32.totalorder %s487, 31
      %s489 = scalar_select %p488, %s487, 31
      %s490 = smul.addr %s489, 8
      %s491 = scalar_lea.vmem %s14, %s490
      %s492 = smul.u32 16, %s25
      %v494 = vld [vmem:[%s479] sm:$0xf]
      %v495 = vld [vmem:[%s479 + $0x4] sm:$0xf]
      %v496 = vld [vmem:[%s479 + $0x8] sm:$0xf]
      %v497 = vld [vmem:[%s479 + $0xc] sm:$0xf]
      %v498 = vld [vmem:[%s479 + $0x10] sm:$0xf]
      %v499 = vld [vmem:[%s479 + $0x14] sm:$0xf]
      %v500 = vld [vmem:[%s479 + $0x18] sm:$0xf]
      %v501 = vld [vmem:[%s479 + $0x1c] sm:$0xf]
      %v502 = vld [vmem:[%s479 + $0x20] sm:$0xf]
      %v503 = vld [vmem:[%s479 + $0x24] sm:$0xf]
      %v504 = vld [vmem:[%s479 + $0x28] sm:$0xf]
      %v505 = vld [vmem:[%s479 + $0x2c] sm:$0xf]
      %v506 = vld [vmem:[%s479 + $0x30] sm:$0xf]
      %v507 = vld [vmem:[%s479 + $0x34] sm:$0xf]
      %v508 = vld [vmem:[%s479 + $0x38] sm:$0xf]
      %v509 = vld [vmem:[%s479 + $0x3c] sm:$0xf]
      %v510 = vld [vmem:[%s1] sm:$0xf]
      %v511 = vld [vmem:[%s1 + $0x4] sm:$0xf]
      %v512 = vld [vmem:[%s1 + $0x8] sm:$0xf]
      %v513 = vld [vmem:[%s1 + $0xc] sm:$0xf]
      %v514 = vld [vmem:[%s2] sm:$0x1]
      %v516 = vlaneseq
      %v517 = vshrl.u32 %v516, 7
      %v518 = vsub.s32 0, %v517
      %v519 = vrot.slane %v514, %v518
      %v537 = vunpack.c.l.b16 %v494
      %v538 = vunpack.c.l.b16 %v495
      %v539 = vunpack.c.l.b16 %v496
      %v540 = vunpack.c.l.b16 %v497
      %v541 = vunpack.c.l.b16 %v498
      %v542 = vunpack.c.l.b16 %v499
      %v543 = vunpack.c.l.b16 %v500
      %v544 = vunpack.c.l.b16 %v501
      %v545 = vunpack.c.l.b16 %v502
      %v546 = vunpack.c.l.b16 %v503
      %v547 = vunpack.c.l.b16 %v504
      %v548 = vunpack.c.l.b16 %v505
      %v549 = vunpack.c.l.b16 %v506
      %v550 = vunpack.c.l.b16 %v507
      %v551 = vunpack.c.l.b16 %v508
      %v552 = vunpack.c.l.b16 %v509
      %v553 = vpack.c.b16 %v538, %v537
      %v554 = vpack.c.b16 %v540, %v539
      %v555 = vpack.c.b16 %v542, %v541
      %v556 = vpack.c.b16 %v544, %v543
      %v557 = vpack.c.b16 %v546, %v545
      %v558 = vpack.c.b16 %v548, %v547
      %v559 = vpack.c.b16 %v550, %v549
      %v560 = vpack.c.b16 %v552, %v551
      %v565 = vunpack.c.l.b16 %v510
      %v566 = vunpack.c.l.b16 %v511
      %v567 = vunpack.c.l.b16 %v512
      %v568 = vunpack.c.l.b16 %v513
      %v569 = vpack.c.b16 %v566, %v565
      %v570 = vpack.c.b16 %v568, %v567
      %vm573 = vcmask 261120
      %v575 = vsel %vm573, %v553, 0
      %v578 = vsel %vm573, %v554, 0
      %v581 = vsel %vm573, %v555, 0
      %v584 = vsel %vm573, %v556, 0
      %v587 = vsel %vm573, %v557, 0
      %v590 = vsel %vm573, %v558, 0
      %v593 = vsel %vm573, %v559, 0
      %v596 = vsel %vm573, %v560, 0
      %598 = vmatprep.subr.bf16.mxu0 0
      %599 = vmatpush1.bf16.msra.mxu0 0
      %600 = vmatprep.subr.bf16.mxu0 0
      %601 = vmatpush1.bf16.msra.mxu0 0
      %602 = vmatprep.subr.bf16.mxu0 0
      %603 = vmatpush1.bf16.msra.mxu0 0
      %604 = vmatprep.subr.bf16.mxu0 0
      %605 = vmatpush1.bf16.msra.mxu0 0
      %606 = vmatprep.subr.bf16.mxu0 0
      %607 = vmatpush1.bf16.msra.mxu0 0
      %608 = vmatprep.subr.bf16.mxu0 0
      %609 = vmatpush1.bf16.msra.mxu0 0
      %610 = vmatprep.subr.bf16.mxu0 0
      %611 = vmatpush1.bf16.msra.mxu0 %v570
      %612 = vmatprep.subr.bf16.mxu0 0
      %613 = vmatpush1.bf16.msra.mxu0 %v569
      %614 = vmatprep.subr.bf16.mxu0 0
      %615 = vmatpush2.bf16.msra.mxu0 0
      %616 = vmatprep.subr.bf16.mxu0 0
      %617 = vmatpush2.bf16.msra.mxu0 0
      %618 = vmatprep.subr.bf16.mxu0 0
      %619 = vmatpush2.bf16.msra.mxu0 0
      %620 = vmatprep.subr.bf16.mxu0 0
      %621 = vmatpush2.bf16.msra.mxu0 0
      %622 = vmatprep.subr.bf16.mxu0 0
      %623 = vmatpush2.bf16.msra.mxu0 0
      %624 = vmatprep.subr.bf16.mxu0 0
      %625 = vmatpush2.bf16.msra.mxu0 0
      %626 = vmatprep.subr.bf16.mxu0 0
      %627 = vmatpush2.bf16.msra.mxu0 0
      %628 = vmatprep.subr.bf16.mxu0 0
      %629 = vmatpush2.bf16.msra.mxu0 0
      %630 = vmatprep.mubr.bf16.mxu0 0
      %631 = vmatmul.mubr.bf16.gmra.mxu0 %v575
      %v632 = vpop.f32.mrf.mxu0
      %v633 = vadd.f32 %v519, %v632
      %v634 = vpop.f32.mrf.mxu0
      %v635 = vpop.f32.mrf.mxu0
      %v636 = vadd.f32 %v519, %v635
      %v637 = vpop.f32.mrf.mxu0
      %638 = vmatprep.mubr.bf16.mxu0 0
      %639 = vmatmul.mubr.bf16.gmra.mxu0 %v578
      %v640 = vpop.f32.mrf.mxu0
      %v641 = vadd.f32 %v519, %v640
      %v642 = vpop.f32.mrf.mxu0
      %v643 = vpop.f32.mrf.mxu0
      %v644 = vadd.f32 %v519, %v643
      %v645 = vpop.f32.mrf.mxu0
      %646 = vmatprep.mubr.bf16.mxu0 0
      %647 = vmatmul.mubr.bf16.gmra.mxu0 %v581
      %v648 = vpop.f32.mrf.mxu0
      %v649 = vadd.f32 %v519, %v648
      %v650 = vpop.f32.mrf.mxu0
      %v651 = vpop.f32.mrf.mxu0
      %v652 = vadd.f32 %v519, %v651
      %v653 = vpop.f32.mrf.mxu0
      %654 = vmatprep.mubr.bf16.mxu0 0
      %655 = vmatmul.mubr.bf16.gmra.mxu0 %v584
      %v656 = vpop.f32.mrf.mxu0
      %v657 = vadd.f32 %v519, %v656
      %v658 = vpop.f32.mrf.mxu0
      %v659 = vpop.f32.mrf.mxu0
      %v660 = vadd.f32 %v519, %v659
      %v661 = vpop.f32.mrf.mxu0
      %662 = vmatprep.mubr.bf16.mxu0 0
      %663 = vmatmul.mubr.bf16.gmra.mxu0 %v587
      %v664 = vpop.f32.mrf.mxu0
      %v665 = vadd.f32 %v519, %v664
      %v666 = vpop.f32.mrf.mxu0
      %v667 = vpop.f32.mrf.mxu0
      %v668 = vadd.f32 %v519, %v667
      %v669 = vpop.f32.mrf.mxu0
      %670 = vmatprep.mubr.bf16.mxu0 0
      %671 = vmatmul.mubr.bf16.gmra.mxu0 %v590
      %v672 = vpop.f32.mrf.mxu0
      %v673 = vadd.f32 %v519, %v672
      %v674 = vpop.f32.mrf.mxu0
      %v675 = vpop.f32.mrf.mxu0
      %v676 = vadd.f32 %v519, %v675
      %v677 = vpop.f32.mrf.mxu0
      %678 = vmatprep.mubr.bf16.mxu0 0
      %679 = vmatmul.mubr.bf16.gmra.mxu0 %v593
      %v680 = vpop.f32.mrf.mxu0
      %v681 = vadd.f32 %v519, %v680
      %v682 = vpop.f32.mrf.mxu0
      %v683 = vpop.f32.mrf.mxu0
      %v684 = vadd.f32 %v519, %v683
      %v685 = vpop.f32.mrf.mxu0
      %686 = vmatprep.mubr.bf16.mxu0 0
      %687 = vmatmul.mubr.bf16.gmra.mxu0 %v596
      %v688 = vpop.f32.mrf.mxu0
      %v689 = vadd.f32 %v519, %v688
      %v690 = vpop.f32.mrf.mxu0
      %v691 = vpop.f32.mrf.mxu0
      %v692 = vadd.f32 %v519, %v691
      %v693 = vpop.f32.mrf.mxu0
      %694 = vdwg.mxu0
      %v695 = vmax.f32 %v633, 0.0
      %v696 = vmax.f32 %v636, 0.0
      %v697 = vmax.f32 %v641, 0.0
      %v698 = vmax.f32 %v644, 0.0
      %v699 = vmax.f32 %v649, 0.0
      %v700 = vmax.f32 %v652, 0.0
      %v701 = vmax.f32 %v657, 0.0
      %v702 = vmax.f32 %v660, 0.0
      %v703 = vmax.f32 %v665, 0.0
      %v704 = vmax.f32 %v668, 0.0
      %v705 = vmax.f32 %v673, 0.0
      %v706 = vmax.f32 %v676, 0.0
      %v707 = vmax.f32 %v681, 0.0
      %v708 = vmax.f32 %v684, 0.0
      %v709 = vmax.f32 %v689, 0.0
      %v710 = vmax.f32 %v692, 0.0
      %v711 = vpack.c.bf16 %v696, %v695
      %v712 = vpack.c.bf16 %v698, %v697
      %v713 = vpack.c.bf16 %v700, %v699
      %v714 = vpack.c.bf16 %v702, %v701
      %v715 = vpack.c.bf16 %v704, %v703
      %v716 = vpack.c.bf16 %v706, %v705
      %v717 = vpack.c.bf16 %v708, %v707
      %v718 = vpack.c.bf16 %v710, %v709
      %v719 = vld [vmem:[%s3] sm:$0xf]
      %v720 = vld [vmem:[%s3 + $0x4] sm:$0xf]
      %v721 = vld [vmem:[%s3 + $0x8] sm:$0xf]
      %v722 = vld [vmem:[%s3 + $0xc] sm:$0xf]
      %v723 = vld [vmem:[%s3 + $0x10] sm:$0xf]
      %v724 = vld [vmem:[%s3 + $0x14] sm:$0xf]
      %v725 = vld [vmem:[%s3 + $0x18] sm:$0xf]
      %v726 = vld [vmem:[%s3 + $0x1c] sm:$0xf]
      %v727 = vld [vmem:[%s4] sm:$0x1]
      %v729 = vlaneseq
      %v730 = vshrl.u32 %v729, 7
      %v731 = vsub.s32 0, %v730
      %v732 = vrot.slane %v727, %v731
      %v742 = vunpack.c.l.b16 %v719
      %v743 = vunpack.c.l.b16 %v720
      %v744 = vunpack.c.l.b16 %v721
      %v745 = vunpack.c.l.b16 %v722
      %v746 = vunpack.c.l.b16 %v723
      %v747 = vunpack.c.l.b16 %v724
      %v748 = vunpack.c.l.b16 %v725
      %v749 = vunpack.c.l.b16 %v726
      %v750 = vpack.c.b16 %v743, %v742
      %v751 = vpack.c.b16 %v745, %v744
      %v752 = vpack.c.b16 %v747, %v746
      %v753 = vpack.c.b16 %v749, %v748
      %vm758 = vcmask 523264
      %v760 = vsel %vm758, %v711, 0
      %v763 = vsel %vm758, %v712, 0
      %v766 = vsel %vm758, %v713, 0
      %v769 = vsel %vm758, %v714, 0
      %v772 = vsel %vm758, %v715, 0
      %v775 = vsel %vm758, %v716, 0
      %v778 = vsel %vm758, %v717, 0
      %v781 = vsel %vm758, %v718, 0
      %783 = vmatprep.subr.bf16.mxu0 0
      %784 = vmatpush1.bf16.msra.mxu0 0
      %785 = vmatprep.subr.bf16.mxu0 0
      %786 = vmatpush1.bf16.msra.mxu0 0
      %787 = vmatprep.subr.bf16.mxu0 0
      %788 = vmatpush1.bf16.msra.mxu0 0
      %789 = vmatprep.subr.bf16.mxu0 0
      %790 = vmatpush1.bf16.msra.mxu0 0
      %791 = vmatprep.subr.bf16.mxu0 0
      %792 = vmatpush1.bf16.msra.mxu0 %v753
      %793 = vmatprep.subr.bf16.mxu0 0
      %794 = vmatpush1.bf16.msra.mxu0 %v752
      %795 = vmatprep.subr.bf16.mxu0 0
      %796 = vmatpush1.bf16.msra.mxu0 %v751
      %797 = vmatprep.subr.bf16.mxu0 0
      %798 = vmatpush1.bf16.msra.mxu0 %v750
      %799 = vmatprep.subr.bf16.mxu0 0
      %800 = vmatpush2.bf16.msra.mxu0 0
      %801 = vmatprep.subr.bf16.mxu0 0
      %802 = vmatpush2.bf16.msra.mxu0 0
      %803 = vmatprep.subr.bf16.mxu0 0
      %804 = vmatpush2.bf16.msra.mxu0 0
      %805 = vmatprep.subr.bf16.mxu0 0
      %806 = vmatpush2.bf16.msra.mxu0 0
      %807 = vmatprep.subr.bf16.mxu0 0
      %808 = vmatpush2.bf16.msra.mxu0 0
      %809 = vmatprep.subr.bf16.mxu0 0
      %810 = vmatpush2.bf16.msra.mxu0 0
      %811 = vmatprep.subr.bf16.mxu0 0
      %812 = vmatpush2.bf16.msra.mxu0 0
      %813 = vmatprep.subr.bf16.mxu0 0
      %814 = vmatpush2.bf16.msra.mxu0 0
      %815 = vmatprep.mubr.bf16.mxu0 0
      %816 = vmatmul.mubr.bf16.gmra.mxu0 %v760
      %v817 = vpop.f32.mrf.mxu0
      %v818 = vadd.f32 %v732, %v817
      %v819 = vpop.f32.mrf.mxu0
      %v820 = vpop.f32.mrf.mxu0
      %v821 = vadd.f32 %v732, %v820
      %v822 = vpop.f32.mrf.mxu0
      %823 = vmatprep.mubr.bf16.mxu0 0
      %824 = vmatmul.mubr.bf16.gmra.mxu0 %v763
      %v825 = vpop.f32.mrf.mxu0
      %v826 = vadd.f32 %v732, %v825
      %v827 = vpop.f32.mrf.mxu0
      %v828 = vpop.f32.mrf.mxu0
      %v829 = vadd.f32 %v732, %v828
      %v830 = vpop.f32.mrf.mxu0
      %831 = vmatprep.mubr.bf16.mxu0 0
      %832 = vmatmul.mubr.bf16.gmra.mxu0 %v766
      %v833 = vpop.f32.mrf.mxu0
      %v834 = vadd.f32 %v732, %v833
      %v835 = vpop.f32.mrf.mxu0
      %v836 = vpop.f32.mrf.mxu0
      %v837 = vadd.f32 %v732, %v836
      %v838 = vpop.f32.mrf.mxu0
      %839 = vmatprep.mubr.bf16.mxu0 0
      %840 = vmatmul.mubr.bf16.gmra.mxu0 %v769
      %v841 = vpop.f32.mrf.mxu0
      %v842 = vadd.f32 %v732, %v841
      %v843 = vpop.f32.mrf.mxu0
      %v844 = vpop.f32.mrf.mxu0
      %v845 = vadd.f32 %v732, %v844
      %v846 = vpop.f32.mrf.mxu0
      %847 = vmatprep.mubr.bf16.mxu0 0
      %848 = vmatmul.mubr.bf16.gmra.mxu0 %v772
      %v849 = vpop.f32.mrf.mxu0
      %v850 = vadd.f32 %v732, %v849
      %v851 = vpop.f32.mrf.mxu0
      %v852 = vpop.f32.mrf.mxu0
      %v853 = vadd.f32 %v732, %v852
      %v854 = vpop.f32.mrf.mxu0
      %855 = vmatprep.mubr.bf16.mxu0 0
      %856 = vmatmul.mubr.bf16.gmra.mxu0 %v775
      %v857 = vpop.f32.mrf.mxu0
      %v858 = vadd.f32 %v732, %v857
      %v859 = vpop.f32.mrf.mxu0
      %v860 = vpop.f32.mrf.mxu0
      %v861 = vadd.f32 %v732, %v860
      %v862 = vpop.f32.mrf.mxu0
      %863 = vmatprep.mubr.bf16.mxu0 0
      %864 = vmatmul.mubr.bf16.gmra.mxu0 %v778
      %v865 = vpop.f32.mrf.mxu0
      %v866 = vadd.f32 %v732, %v865
      %v867 = vpop.f32.mrf.mxu0
      %v868 = vpop.f32.mrf.mxu0
      %v869 = vadd.f32 %v732, %v868
      %v870 = vpop.f32.mrf.mxu0
      %871 = vmatprep.mubr.bf16.mxu0 0
      %872 = vmatmul.mubr.bf16.gmra.mxu0 %v781
      %v873 = vpop.f32.mrf.mxu0
      %v874 = vadd.f32 %v732, %v873
      %v875 = vpop.f32.mrf.mxu0
      %v876 = vpop.f32.mrf.mxu0
      %v877 = vadd.f32 %v732, %v876
      %v878 = vpop.f32.mrf.mxu0
      %879 = vdwg.mxu0
      %v880 = vmax.f32 %v818, 0.0
      %v881 = vmax.f32 %v821, 0.0
      %v882 = vmax.f32 %v826, 0.0
      %v883 = vmax.f32 %v829, 0.0
      %v884 = vmax.f32 %v834, 0.0
      %v885 = vmax.f32 %v837, 0.0
      %v886 = vmax.f32 %v842, 0.0
      %v887 = vmax.f32 %v845, 0.0
      %v888 = vmax.f32 %v850, 0.0
      %v889 = vmax.f32 %v853, 0.0
      %v890 = vmax.f32 %v858, 0.0
      %v891 = vmax.f32 %v861, 0.0
      %v892 = vmax.f32 %v866, 0.0
      %v893 = vmax.f32 %v869, 0.0
      %v894 = vmax.f32 %v874, 0.0
      %v895 = vmax.f32 %v877, 0.0
      %v896 = vpack.c.bf16 %v881, %v880
      %v897 = vpack.c.bf16 %v883, %v882
      %v898 = vpack.c.bf16 %v885, %v884
      %v899 = vpack.c.bf16 %v887, %v886
      %v900 = vpack.c.bf16 %v889, %v888
      %v901 = vpack.c.bf16 %v891, %v890
      %v902 = vpack.c.bf16 %v893, %v892
      %v903 = vpack.c.bf16 %v895, %v894
      %v904 = vld [vmem:[%s5] sm:$0xf]
      %v905 = vld [vmem:[%s5 + $0x4] sm:$0xf]
      %v906 = vld [vmem:[%s5 + $0x8] sm:$0xf]
      %v907 = vld [vmem:[%s5 + $0xc] sm:$0xf]
      %v908 = vld [vmem:[%s5 + $0x10] sm:$0xf]
      %v909 = vld [vmem:[%s5 + $0x14] sm:$0xf]
      %v910 = vld [vmem:[%s5 + $0x18] sm:$0xf]
      %v911 = vld [vmem:[%s5 + $0x1c] sm:$0xf]
      %v912 = vld [vmem:[%s6] sm:$0x1]
      %v914 = vlaneseq
      %v915 = vshrl.u32 %v914, 7
      %v916 = vsub.s32 0, %v915
      %v917 = vrot.slane %v912, %v916
      %v927 = vunpack.c.l.b16 %v904
      %v928 = vunpack.c.l.b16 %v905
      %v929 = vunpack.c.l.b16 %v906
      %v930 = vunpack.c.l.b16 %v907
      %v931 = vunpack.c.l.b16 %v908
      %v932 = vunpack.c.l.b16 %v909
      %v933 = vunpack.c.l.b16 %v910
      %v934 = vunpack.c.l.b16 %v911
      %v935 = vpack.c.b16 %v928, %v927
      %v936 = vpack.c.b16 %v930, %v929
      %v937 = vpack.c.b16 %v932, %v931
      %v938 = vpack.c.b16 %v934, %v933
      %v944 = vsel %vm758, %v896, 0
      %v947 = vsel %vm758, %v897, 0
      %v950 = vsel %vm758, %v898, 0
      %v953 = vsel %vm758, %v899, 0
      %v956 = vsel %vm758, %v900, 0
      %v959 = vsel %vm758, %v901, 0
      %v962 = vsel %vm758, %v902, 0
      %v965 = vsel %vm758, %v903, 0
      %967 = vmatprep.subr.bf16.mxu0 0
      %968 = vmatpush1.bf16.msra.mxu0 0
      %969 = vmatprep.subr.bf16.mxu0 0
      %970 = vmatpush1.bf16.msra.mxu0 0
      %971 = vmatprep.subr.bf16.mxu0 0
      %972 = vmatpush1.bf16.msra.mxu0 0
      %973 = vmatprep.subr.bf16.mxu0 0
      %974 = vmatpush1.bf16.msra.mxu0 0
      %975 = vmatprep.subr.bf16.mxu0 0
      %976 = vmatpush1.bf16.msra.mxu0 %v938
      %977 = vmatprep.subr.bf16.mxu0 0
      %978 = vmatpush1.bf16.msra.mxu0 %v937
      %979 = vmatprep.subr.bf16.mxu0 0
      %980 = vmatpush1.bf16.msra.mxu0 %v936
      %981 = vmatprep.subr.bf16.mxu0 0
      %982 = vmatpush1.bf16.msra.mxu0 %v935
      %983 = vmatprep.subr.bf16.mxu0 0
      %984 = vmatpush2.bf16.msra.mxu0 0
      %985 = vmatprep.subr.bf16.mxu0 0
      %986 = vmatpush2.bf16.msra.mxu0 0
      %987 = vmatprep.subr.bf16.mxu0 0
      %988 = vmatpush2.bf16.msra.mxu0 0
      %989 = vmatprep.subr.bf16.mxu0 0
      %990 = vmatpush2.bf16.msra.mxu0 0
      %991 = vmatprep.subr.bf16.mxu0 0
      %992 = vmatpush2.bf16.msra.mxu0 0
      %993 = vmatprep.subr.bf16.mxu0 0
      %994 = vmatpush2.bf16.msra.mxu0 0
      %995 = vmatprep.subr.bf16.mxu0 0
      %996 = vmatpush2.bf16.msra.mxu0 0
      %997 = vmatprep.subr.bf16.mxu0 0
      %998 = vmatpush2.bf16.msra.mxu0 0
      %999 = vmatprep.mubr.bf16.mxu0 0
      %1000 = vmatmul.mubr.bf16.gmra.mxu0 %v944
      %v1001 = vpop.f32.mrf.mxu0
      %v1002 = vadd.f32 %v917, %v1001
      %v1003 = vpop.f32.mrf.mxu0
      %v1004 = vpop.f32.mrf.mxu0
      %v1005 = vadd.f32 %v917, %v1004
      %v1006 = vpop.f32.mrf.mxu0
      %1007 = vmatprep.mubr.bf16.mxu0 0
      %1008 = vmatmul.mubr.bf16.gmra.mxu0 %v947
      %v1009 = vpop.f32.mrf.mxu0
      %v1010 = vadd.f32 %v917, %v1009
      %v1011 = vpop.f32.mrf.mxu0
      %v1012 = vpop.f32.mrf.mxu0
      %v1013 = vadd.f32 %v917, %v1012
      %v1014 = vpop.f32.mrf.mxu0
      %1015 = vmatprep.mubr.bf16.mxu0 0
      %1016 = vmatmul.mubr.bf16.gmra.mxu0 %v950
      %v1017 = vpop.f32.mrf.mxu0
      %v1018 = vadd.f32 %v917, %v1017
      %v1019 = vpop.f32.mrf.mxu0
      %v1020 = vpop.f32.mrf.mxu0
      %v1021 = vadd.f32 %v917, %v1020
      %v1022 = vpop.f32.mrf.mxu0
      %1023 = vmatprep.mubr.bf16.mxu0 0
      %1024 = vmatmul.mubr.bf16.gmra.mxu0 %v953
      %v1025 = vpop.f32.mrf.mxu0
      %v1026 = vadd.f32 %v917, %v1025
      %v1027 = vpop.f32.mrf.mxu0
      %v1028 = vpop.f32.mrf.mxu0
      %v1029 = vadd.f32 %v917, %v1028
      %v1030 = vpop.f32.mrf.mxu0
      %1031 = vmatprep.mubr.bf16.mxu0 0
      %1032 = vmatmul.mubr.bf16.gmra.mxu0 %v956
      %v1033 = vpop.f32.mrf.mxu0
      %v1034 = vadd.f32 %v917, %v1033
      %v1035 = vpop.f32.mrf.mxu0
      %v1036 = vpop.f32.mrf.mxu0
      %v1037 = vadd.f32 %v917, %v1036
      %v1038 = vpop.f32.mrf.mxu0
      %1039 = vmatprep.mubr.bf16.mxu0 0
      %1040 = vmatmul.mubr.bf16.gmra.mxu0 %v959
      %v1041 = vpop.f32.mrf.mxu0
      %v1042 = vadd.f32 %v917, %v1041
      %v1043 = vpop.f32.mrf.mxu0
      %v1044 = vpop.f32.mrf.mxu0
      %v1045 = vadd.f32 %v917, %v1044
      %v1046 = vpop.f32.mrf.mxu0
      %1047 = vmatprep.mubr.bf16.mxu0 0
      %1048 = vmatmul.mubr.bf16.gmra.mxu0 %v962
      %v1049 = vpop.f32.mrf.mxu0
      %v1050 = vadd.f32 %v917, %v1049
      %v1051 = vpop.f32.mrf.mxu0
      %v1052 = vpop.f32.mrf.mxu0
      %v1053 = vadd.f32 %v917, %v1052
      %v1054 = vpop.f32.mrf.mxu0
      %1055 = vmatprep.mubr.bf16.mxu0 0
      %1056 = vmatmul.mubr.bf16.gmra.mxu0 %v965
      %v1057 = vpop.f32.mrf.mxu0
      %v1058 = vadd.f32 %v917, %v1057
      %v1059 = vpop.f32.mrf.mxu0
      %v1060 = vpop.f32.mrf.mxu0
      %v1061 = vadd.f32 %v917, %v1060
      %v1062 = vpop.f32.mrf.mxu0
      %1063 = vdwg.mxu0
      %v1064 = vmax.f32 %v1002, 0.0
      %v1065 = vmax.f32 %v1005, 0.0
      %v1066 = vmax.f32 %v1010, 0.0
      %v1067 = vmax.f32 %v1013, 0.0
      %v1068 = vmax.f32 %v1018, 0.0
      %v1069 = vmax.f32 %v1021, 0.0
      %v1070 = vmax.f32 %v1026, 0.0
      %v1071 = vmax.f32 %v1029, 0.0
      %v1072 = vmax.f32 %v1034, 0.0
      %v1073 = vmax.f32 %v1037, 0.0
      %v1074 = vmax.f32 %v1042, 0.0
      %v1075 = vmax.f32 %v1045, 0.0
      %v1076 = vmax.f32 %v1050, 0.0
      %v1077 = vmax.f32 %v1053, 0.0
      %v1078 = vmax.f32 %v1058, 0.0
      %v1079 = vmax.f32 %v1061, 0.0
      %v1080 = vpack.c.bf16 %v1065, %v1064
      %v1081 = vpack.c.bf16 %v1067, %v1066
      %v1082 = vpack.c.bf16 %v1069, %v1068
      %v1083 = vpack.c.bf16 %v1071, %v1070
      %v1084 = vpack.c.bf16 %v1073, %v1072
      %v1085 = vpack.c.bf16 %v1075, %v1074
      %v1086 = vpack.c.bf16 %v1077, %v1076
      %v1087 = vpack.c.bf16 %v1079, %v1078
      %v1088 = vld [vmem:[%s7] sm:$0xf]
      %v1089 = vld [vmem:[%s7 + $0x4] sm:$0xf]
      %v1090 = vld [vmem:[%s7 + $0x8] sm:$0xf]
      %v1091 = vld [vmem:[%s7 + $0xc] sm:$0xf]
      %v1092 = vld [vmem:[%s8] sm:$0x1]
      %v1094 = vlaneseq
      %v1095 = vshrl.u32 %v1094, 7
      %v1096 = vsub.s32 0, %v1095
      %v1097 = vrot.slane %v1092, %v1096
      %v1103 = vunpack.c.l.b16 %v1088
      %v1104 = vunpack.c.l.b16 %v1089
      %v1105 = vunpack.c.l.b16 %v1090
      %v1106 = vunpack.c.l.b16 %v1091
      %v1107 = vpack.c.b16 %v1104, %v1103
      %v1108 = vpack.c.b16 %v1106, %v1105
      %v1112 = vsel %vm573, %v1080, 0
      %v1115 = vsel %vm573, %v1081, 0
      %v1118 = vsel %vm573, %v1082, 0
      %v1121 = vsel %vm573, %v1083, 0
      %v1124 = vsel %vm573, %v1084, 0
      %v1127 = vsel %vm573, %v1085, 0
      %v1130 = vsel %vm573, %v1086, 0
      %v1133 = vsel %vm573, %v1087, 0
      %1135 = vmatprep.subr.bf16.mxu0 0
      %1136 = vmatpush1.bf16.msra.mxu0 0
      %1137 = vmatprep.subr.bf16.mxu0 0
      %1138 = vmatpush1.bf16.msra.mxu0 0
      %1139 = vmatprep.subr.bf16.mxu0 0
      %1140 = vmatpush1.bf16.msra.mxu0 0
      %1141 = vmatprep.subr.bf16.mxu0 0
      %1142 = vmatpush1.bf16.msra.mxu0 0
      %1143 = vmatprep.subr.bf16.mxu0 0
      %1144 = vmatpush1.bf16.msra.mxu0 0
      %1145 = vmatprep.subr.bf16.mxu0 0
      %1146 = vmatpush1.bf16.msra.mxu0 0
      %1147 = vmatprep.subr.bf16.mxu0 0
      %1148 = vmatpush1.bf16.msra.mxu0 %v1108
      %1149 = vmatprep.subr.bf16.mxu0 0
      %1150 = vmatpush1.bf16.msra.mxu0 %v1107
      %1151 = vmatprep.subr.bf16.mxu0 0
      %1152 = vmatpush2.bf16.msra.mxu0 0
      %1153 = vmatprep.subr.bf16.mxu0 0
      %1154 = vmatpush2.bf16.msra.mxu0 0
      %1155 = vmatprep.subr.bf16.mxu0 0
      %1156 = vmatpush2.bf16.msra.mxu0 0
      %1157 = vmatprep.subr.bf16.mxu0 0
      %1158 = vmatpush2.bf16.msra.mxu0 0
      %1159 = vmatprep.subr.bf16.mxu0 0
      %1160 = vmatpush2.bf16.msra.mxu0 0
      %1161 = vmatprep.subr.bf16.mxu0 0
      %1162 = vmatpush2.bf16.msra.mxu0 0
      %1163 = vmatprep.subr.bf16.mxu0 0
      %1164 = vmatpush2.bf16.msra.mxu0 0
      %1165 = vmatprep.subr.bf16.mxu0 0
      %1166 = vmatpush2.bf16.msra.mxu0 0
      %1167 = vmatprep.mubr.bf16.mxu0 0
      %1168 = vmatmul.mubr.bf16.gmra.mxu0 %v1112
      %v1169 = vpop.f32.mrf.mxu0
      %v1170 = vadd.f32 %v1097, %v1169
      %v1171 = vpop.f32.mrf.mxu0
      %v1172 = vpop.f32.mrf.mxu0
      %v1173 = vadd.f32 %v1097, %v1172
      %v1174 = vpop.f32.mrf.mxu0
      %1175 = vmatprep.mubr.bf16.mxu0 0
      %1176 = vmatmul.mubr.bf16.gmra.mxu0 %v1115
      %v1177 = vpop.f32.mrf.mxu0
      %v1178 = vadd.f32 %v1097, %v1177
      %v1179 = vpop.f32.mrf.mxu0
      %v1180 = vpop.f32.mrf.mxu0
      %v1181 = vadd.f32 %v1097, %v1180
      %v1182 = vpop.f32.mrf.mxu0
      %1183 = vmatprep.mubr.bf16.mxu0 0
      %1184 = vmatmul.mubr.bf16.gmra.mxu0 %v1118
      %v1185 = vpop.f32.mrf.mxu0
      %v1186 = vadd.f32 %v1097, %v1185
      %v1187 = vpop.f32.mrf.mxu0
      %v1188 = vpop.f32.mrf.mxu0
      %v1189 = vadd.f32 %v1097, %v1188
      %v1190 = vpop.f32.mrf.mxu0
      %1191 = vmatprep.mubr.bf16.mxu0 0
      %1192 = vmatmul.mubr.bf16.gmra.mxu0 %v1121
      %v1193 = vpop.f32.mrf.mxu0
      %v1194 = vadd.f32 %v1097, %v1193
      %v1195 = vpop.f32.mrf.mxu0
      %v1196 = vpop.f32.mrf.mxu0
      %v1197 = vadd.f32 %v1097, %v1196
      %v1198 = vpop.f32.mrf.mxu0
      %1199 = vmatprep.mubr.bf16.mxu0 0
      %1200 = vmatmul.mubr.bf16.gmra.mxu0 %v1124
      %v1201 = vpop.f32.mrf.mxu0
      %v1202 = vadd.f32 %v1097, %v1201
      %v1203 = vpop.f32.mrf.mxu0
      %v1204 = vpop.f32.mrf.mxu0
      %v1205 = vadd.f32 %v1097, %v1204
      %v1206 = vpop.f32.mrf.mxu0
      %1207 = vmatprep.mubr.bf16.mxu0 0
      %1208 = vmatmul.mubr.bf16.gmra.mxu0 %v1127
      %v1209 = vpop.f32.mrf.mxu0
      %v1210 = vadd.f32 %v1097, %v1209
      %v1211 = vpop.f32.mrf.mxu0
      %v1212 = vpop.f32.mrf.mxu0
      %v1213 = vadd.f32 %v1097, %v1212
      %v1214 = vpop.f32.mrf.mxu0
      %1215 = vmatprep.mubr.bf16.mxu0 0
      %1216 = vmatmul.mubr.bf16.gmra.mxu0 %v1130
      %v1217 = vpop.f32.mrf.mxu0
      %v1218 = vadd.f32 %v1097, %v1217
      %v1219 = vpop.f32.mrf.mxu0
      %v1220 = vpop.f32.mrf.mxu0
      %v1221 = vadd.f32 %v1097, %v1220
      %v1222 = vpop.f32.mrf.mxu0
      %1223 = vmatprep.mubr.bf16.mxu0 0
      %1224 = vmatmul.mubr.bf16.gmra.mxu0 %v1133
      %v1225 = vpop.f32.mrf.mxu0
      %v1226 = vadd.f32 %v1097, %v1225
      %v1227 = vpop.f32.mrf.mxu0
      %v1228 = vpop.f32.mrf.mxu0
      %v1229 = vadd.f32 %v1097, %v1228
      %v1230 = vpop.f32.mrf.mxu0
      %1231 = vdwg.mxu0
      %v1232 = vmax.f32 %v1170, 0.0
      %v1233 = vmax.f32 %v1173, 0.0
      %v1234 = vmax.f32 %v1178, 0.0
      %v1235 = vmax.f32 %v1181, 0.0
      %v1236 = vmax.f32 %v1186, 0.0
      %v1237 = vmax.f32 %v1189, 0.0
      %v1238 = vmax.f32 %v1194, 0.0
      %v1239 = vmax.f32 %v1197, 0.0
      %v1240 = vmax.f32 %v1202, 0.0
      %v1241 = vmax.f32 %v1205, 0.0
      %v1242 = vmax.f32 %v1210, 0.0
      %v1243 = vmax.f32 %v1213, 0.0
      %v1244 = vmax.f32 %v1218, 0.0
      %v1245 = vmax.f32 %v1221, 0.0
      %v1246 = vmax.f32 %v1226, 0.0
      %v1247 = vmax.f32 %v1229, 0.0
      %v1248 = vpack.c.bf16 %v1233, %v1232
      %v1249 = vpack.c.bf16 %v1235, %v1234
      %v1250 = vpack.c.bf16 %v1237, %v1236
      %v1251 = vpack.c.bf16 %v1239, %v1238
      %v1252 = vpack.c.bf16 %v1241, %v1240
      %v1253 = vpack.c.bf16 %v1243, %v1242
      %v1254 = vpack.c.bf16 %v1245, %v1244
      %v1255 = vpack.c.bf16 %v1247, %v1246
      %v1256 = vld [vmem:[%s9] sm:$0xf]
      %v1257 = vld [vmem:[%s9 + $0x4] sm:$0xf]
      %v1258 = vld [vmem:[%s10] sm:$0x1]
      %v1260 = vlaneseq
      %v1261 = vshrl.u32 %v1260, 7
      %v1262 = vsub.s32 0, %v1261
      %v1263 = vrot.slane %v1258, %v1262
      %v1267 = vunpack.c.l.b16 %v1256
      %v1268 = vunpack.c.l.b16 %v1257
      %v1269 = vpack.c.b16 %v1268, %v1267
      %vm1271 = vcmask 130048
      %v1273 = vsel %vm1271, %v1248, 0
      %v1276 = vsel %vm1271, %v1249, 0
      %v1279 = vsel %vm1271, %v1250, 0
      %v1282 = vsel %vm1271, %v1251, 0
      %v1285 = vsel %vm1271, %v1252, 0
      %v1288 = vsel %vm1271, %v1253, 0
      %v1291 = vsel %vm1271, %v1254, 0
      %v1294 = vsel %vm1271, %v1255, 0
      %1296 = vmatprep.subr.bf16.mxu0 0
      %1297 = vmatpush1.bf16.msra.mxu0 0
      %1298 = vmatprep.subr.bf16.mxu0 0
      %1299 = vmatpush1.bf16.msra.mxu0 0
      %1300 = vmatprep.subr.bf16.mxu0 0
      %1301 = vmatpush1.bf16.msra.mxu0 0
      %1302 = vmatprep.subr.bf16.mxu0 0
      %1303 = vmatpush1.bf16.msra.mxu0 0
      %1304 = vmatprep.subr.bf16.mxu0 0
      %1305 = vmatpush1.bf16.msra.mxu0 0
      %1306 = vmatprep.subr.bf16.mxu0 0
      %1307 = vmatpush1.bf16.msra.mxu0 0
      %1308 = vmatprep.subr.bf16.mxu0 0
      %1309 = vmatpush1.bf16.msra.mxu0 0
      %1310 = vmatprep.subr.bf16.mxu0 0
      %1311 = vmatpush1.bf16.msra.mxu0 %v1269
      %1312 = vmatprep.subr.bf16.mxu0 0
      %1313 = vmatpush2.bf16.msra.mxu0 0
      %1314 = vmatprep.subr.bf16.mxu0 0
      %1315 = vmatpush2.bf16.msra.mxu0 0
      %1316 = vmatprep.subr.bf16.mxu0 0
      %1317 = vmatpush2.bf16.msra.mxu0 0
      %1318 = vmatprep.subr.bf16.mxu0 0
      %1319 = vmatpush2.bf16.msra.mxu0 0
      %1320 = vmatprep.subr.bf16.mxu0 0
      %1321 = vmatpush2.bf16.msra.mxu0 0
      %1322 = vmatprep.subr.bf16.mxu0 0
      %1323 = vmatpush2.bf16.msra.mxu0 0
      %1324 = vmatprep.subr.bf16.mxu0 0
      %1325 = vmatpush2.bf16.msra.mxu0 0
      %1326 = vmatprep.subr.bf16.mxu0 0
      %1327 = vmatpush2.bf16.msra.mxu0 0
      %1328 = vmatprep.mubr.bf16.mxu0 0
      %1329 = vmatmul.mubr.bf16.gmra.mxu0 %v1273
      %v1330 = vpop.f32.mrf.mxu0
      %v1331 = vadd.f32 %v1263, %v1330
      %v1332 = vpop.f32.mrf.mxu0
      %v1333 = vpop.f32.mrf.mxu0
      %v1334 = vadd.f32 %v1263, %v1333
      %v1335 = vpop.f32.mrf.mxu0
      %1336 = vmatprep.mubr.bf16.mxu0 0
      %1337 = vmatmul.mubr.bf16.gmra.mxu0 %v1276
      %v1338 = vpop.f32.mrf.mxu0
      %v1339 = vadd.f32 %v1263, %v1338
      %v1340 = vpop.f32.mrf.mxu0
      %v1341 = vpop.f32.mrf.mxu0
      %v1342 = vadd.f32 %v1263, %v1341
      %v1343 = vpop.f32.mrf.mxu0
      %1344 = vmatprep.mubr.bf16.mxu0 0
      %1345 = vmatmul.mubr.bf16.gmra.mxu0 %v1279
      %v1346 = vpop.f32.mrf.mxu0
      %v1347 = vadd.f32 %v1263, %v1346
      %v1348 = vpop.f32.mrf.mxu0
      %v1349 = vpop.f32.mrf.mxu0
      %v1350 = vadd.f32 %v1263, %v1349
      %v1351 = vpop.f32.mrf.mxu0
      %1352 = vmatprep.mubr.bf16.mxu0 0
      %1353 = vmatmul.mubr.bf16.gmra.mxu0 %v1282
      %v1354 = vpop.f32.mrf.mxu0
      %v1355 = vadd.f32 %v1263, %v1354
      %v1356 = vpop.f32.mrf.mxu0
      %v1357 = vpop.f32.mrf.mxu0
      %v1358 = vadd.f32 %v1263, %v1357
      %v1359 = vpop.f32.mrf.mxu0
      %1360 = vmatprep.mubr.bf16.mxu0 0
      %1361 = vmatmul.mubr.bf16.gmra.mxu0 %v1285
      %v1362 = vpop.f32.mrf.mxu0
      %v1363 = vadd.f32 %v1263, %v1362
      %v1364 = vpop.f32.mrf.mxu0
      %v1365 = vpop.f32.mrf.mxu0
      %v1366 = vadd.f32 %v1263, %v1365
      %v1367 = vpop.f32.mrf.mxu0
      %1368 = vmatprep.mubr.bf16.mxu0 0
      %1369 = vmatmul.mubr.bf16.gmra.mxu0 %v1288
      %v1370 = vpop.f32.mrf.mxu0
      %v1371 = vadd.f32 %v1263, %v1370
      %v1372 = vpop.f32.mrf.mxu0
      %v1373 = vpop.f32.mrf.mxu0
      %v1374 = vadd.f32 %v1263, %v1373
      %v1375 = vpop.f32.mrf.mxu0
      %1376 = vmatprep.mubr.bf16.mxu0 0
      %1377 = vmatmul.mubr.bf16.gmra.mxu0 %v1291
      %v1378 = vpop.f32.mrf.mxu0
      %v1379 = vadd.f32 %v1263, %v1378
      %v1380 = vpop.f32.mrf.mxu0
      %v1381 = vpop.f32.mrf.mxu0
      %v1382 = vadd.f32 %v1263, %v1381
      %v1383 = vpop.f32.mrf.mxu0
      %1384 = vmatprep.mubr.bf16.mxu0 0
      %1385 = vmatmul.mubr.bf16.gmra.mxu0 %v1294
      %v1386 = vpop.f32.mrf.mxu0
      %v1387 = vadd.f32 %v1263, %v1386
      %v1388 = vpop.f32.mrf.mxu0
      %v1389 = vpop.f32.mrf.mxu0
      %v1390 = vadd.f32 %v1263, %v1389
      %v1391 = vpop.f32.mrf.mxu0
      %1392 = vdwg.mxu0
      %v1393 = vld [vmem:[%s11] sm:$0xf]
      %v1394 = vld [vmem:[%s11 + $0x4] sm:$0xf]
      %v1395 = vld [vmem:[%s12] sm:$0x1]
      %v1397 = vlaneseq
      %v1398 = vshrl.u32 %v1397, 7
      %v1399 = vsub.s32 0, %v1398
      %v1400 = vrot.slane %v1395, %v1399
      %v1404 = vunpack.c.l.b16 %v1393
      %v1405 = vunpack.c.l.b16 %v1394
      %v1406 = vpack.c.b16 %v1405, %v1404
      %1408 = vmatprep.subr.bf16.mxu0 0
      %1409 = vmatpush1.bf16.msra.mxu0 0
      %1410 = vmatprep.subr.bf16.mxu0 0
      %1411 = vmatpush1.bf16.msra.mxu0 0
      %1412 = vmatprep.subr.bf16.mxu0 0
      %1413 = vmatpush1.bf16.msra.mxu0 0
      %1414 = vmatprep.subr.bf16.mxu0 0
      %1415 = vmatpush1.bf16.msra.mxu0 0
      %1416 = vmatprep.subr.bf16.mxu0 0
      %1417 = vmatpush1.bf16.msra.mxu0 0
      %1418 = vmatprep.subr.bf16.mxu0 0
      %1419 = vmatpush1.bf16.msra.mxu0 0
      %1420 = vmatprep.subr.bf16.mxu0 0
      %1421 = vmatpush1.bf16.msra.mxu0 0
      %1422 = vmatprep.subr.bf16.mxu0 0
      %1423 = vmatpush1.bf16.msra.mxu0 %v1406
      %1424 = vmatprep.subr.bf16.mxu0 0
      %1425 = vmatpush2.bf16.msra.mxu0 0
      %1426 = vmatprep.subr.bf16.mxu0 0
      %1427 = vmatpush2.bf16.msra.mxu0 0
      %1428 = vmatprep.subr.bf16.mxu0 0
      %1429 = vmatpush2.bf16.msra.mxu0 0
      %1430 = vmatprep.subr.bf16.mxu0 0
      %1431 = vmatpush2.bf16.msra.mxu0 0
      %1432 = vmatprep.subr.bf16.mxu0 0
      %1433 = vmatpush2.bf16.msra.mxu0 0
      %1434 = vmatprep.subr.bf16.mxu0 0
      %1435 = vmatpush2.bf16.msra.mxu0 0
      %1436 = vmatprep.subr.bf16.mxu0 0
      %1437 = vmatpush2.bf16.msra.mxu0 0
      %1438 = vmatprep.subr.bf16.mxu0 0
      %1439 = vmatpush2.bf16.msra.mxu0 0
      %1440 = vmatprep.mubr.bf16.mxu0 0
      %1441 = vmatmul.mubr.bf16.gmra.mxu0 %v1273
      %v1442 = vpop.f32.mrf.mxu0
      %v1443 = vadd.f32 %v1400, %v1442
      %v1444 = vpop.f32.mrf.mxu0
      %v1445 = vpop.f32.mrf.mxu0
      %v1446 = vadd.f32 %v1400, %v1445
      %v1447 = vpop.f32.mrf.mxu0
      %1448 = vmatprep.mubr.bf16.mxu0 0
      %1449 = vmatmul.mubr.bf16.gmra.mxu0 %v1276
      %v1450 = vpop.f32.mrf.mxu0
      %v1451 = vadd.f32 %v1400, %v1450
      %v1452 = vpop.f32.mrf.mxu0
      %v1453 = vpop.f32.mrf.mxu0
      %v1454 = vadd.f32 %v1400, %v1453
      %v1455 = vpop.f32.mrf.mxu0
      %1456 = vmatprep.mubr.bf16.mxu0 0
      %1457 = vmatmul.mubr.bf16.gmra.mxu0 %v1279
      %v1458 = vpop.f32.mrf.mxu0
      %v1459 = vadd.f32 %v1400, %v1458
      %v1460 = vpop.f32.mrf.mxu0
      %v1461 = vpop.f32.mrf.mxu0
      %v1462 = vadd.f32 %v1400, %v1461
      %v1463 = vpop.f32.mrf.mxu0
      %1464 = vmatprep.mubr.bf16.mxu0 0
      %1465 = vmatmul.mubr.bf16.gmra.mxu0 %v1282
      %v1466 = vpop.f32.mrf.mxu0
      %v1467 = vadd.f32 %v1400, %v1466
      %v1468 = vpop.f32.mrf.mxu0
      %v1469 = vpop.f32.mrf.mxu0
      %v1470 = vadd.f32 %v1400, %v1469
      %v1471 = vpop.f32.mrf.mxu0
      %1472 = vmatprep.mubr.bf16.mxu0 0
      %1473 = vmatmul.mubr.bf16.gmra.mxu0 %v1285
      %v1474 = vpop.f32.mrf.mxu0
      %v1475 = vadd.f32 %v1400, %v1474
      %v1476 = vpop.f32.mrf.mxu0
      %v1477 = vpop.f32.mrf.mxu0
      %v1478 = vadd.f32 %v1400, %v1477
      %v1479 = vpop.f32.mrf.mxu0
      %1480 = vmatprep.mubr.bf16.mxu0 0
      %1481 = vmatmul.mubr.bf16.gmra.mxu0 %v1288
      %v1482 = vpop.f32.mrf.mxu0
      %v1483 = vadd.f32 %v1400, %v1482
      %v1484 = vpop.f32.mrf.mxu0
      %v1485 = vpop.f32.mrf.mxu0
      %v1486 = vadd.f32 %v1400, %v1485
      %v1487 = vpop.f32.mrf.mxu0
      %1488 = vmatprep.mubr.bf16.mxu0 0
      %1489 = vmatmul.mubr.bf16.gmra.mxu0 %v1291
      %v1490 = vpop.f32.mrf.mxu0
      %v1491 = vadd.f32 %v1400, %v1490
      %v1492 = vpop.f32.mrf.mxu0
      %v1493 = vpop.f32.mrf.mxu0
      %v1494 = vadd.f32 %v1400, %v1493
      %v1495 = vpop.f32.mrf.mxu0
      %1496 = vmatprep.mubr.bf16.mxu0 0
      %1497 = vmatmul.mubr.bf16.gmra.mxu0 %v1294
      %v1498 = vpop.f32.mrf.mxu0
      %v1499 = vadd.f32 %v1400, %v1498
      %v1500 = vpop.f32.mrf.mxu0
      %v1501 = vpop.f32.mrf.mxu0
      %v1502 = vadd.f32 %v1400, %v1501
      %v1503 = vpop.f32.mrf.mxu0
      %1504 = vdwg.mxu0
      %v1505 = vmax.f32 %v1443, 0.0
      %v1506 = vmax.f32 %v1446, 0.0
      %v1507 = vmax.f32 %v1451, 0.0
      %v1508 = vmax.f32 %v1454, 0.0
      %v1509 = vmax.f32 %v1459, 0.0
      %v1510 = vmax.f32 %v1462, 0.0
      %v1511 = vmax.f32 %v1467, 0.0
      %v1512 = vmax.f32 %v1470, 0.0
      %v1513 = vmax.f32 %v1475, 0.0
      %v1514 = vmax.f32 %v1478, 0.0
      %v1515 = vmax.f32 %v1483, 0.0
      %v1516 = vmax.f32 %v1486, 0.0
      %v1517 = vmax.f32 %v1491, 0.0
      %v1518 = vmax.f32 %v1494, 0.0
      %v1519 = vmax.f32 %v1499, 0.0
      %v1520 = vmax.f32 %v1502, 0.0
      %v1521 = vand.u32 2147483647, %v1443
      %v1522 = vand.u32 2147483647, %v1446
      %v1523 = vand.u32 2147483647, %v1451
      %v1524 = vand.u32 2147483647, %v1454
      %v1525 = vand.u32 2147483647, %v1459
      %v1526 = vand.u32 2147483647, %v1462
      %v1527 = vand.u32 2147483647, %v1467
      %v1528 = vand.u32 2147483647, %v1470
      %v1529 = vand.u32 2147483647, %v1475
      %v1530 = vand.u32 2147483647, %v1478
      %v1531 = vand.u32 2147483647, %v1483
      %v1532 = vand.u32 2147483647, %v1486
      %v1533 = vand.u32 2147483647, %v1491
      %v1534 = vand.u32 2147483647, %v1494
      %v1535 = vand.u32 2147483647, %v1499
      %v1536 = vand.u32 2147483647, %v1502
      %v1537 = vsub.f32 0.0, %v1521
      %v1538 = vsub.f32 0.0, %v1522
      %v1539 = vsub.f32 0.0, %v1523
      %v1540 = vsub.f32 0.0, %v1524
      %v1541 = vsub.f32 0.0, %v1525
      %v1542 = vsub.f32 0.0, %v1526
      %v1543 = vsub.f32 0.0, %v1527
      %v1544 = vsub.f32 0.0, %v1528
      %v1545 = vsub.f32 0.0, %v1529
      %v1546 = vsub.f32 0.0, %v1530
      %v1547 = vsub.f32 0.0, %v1531
      %v1548 = vsub.f32 0.0, %v1532
      %v1549 = vsub.f32 0.0, %v1533
      %v1550 = vsub.f32 0.0, %v1534
      %v1551 = vsub.f32 0.0, %v1535
      %v1552 = vsub.f32 0.0, %v1536
      %v1553 = vmul.f32 %v1537, 1.442695
      %v1554 = vpow.pop %v1553
      %v1555 = vmul.f32 %v1538, 1.442695
      %v1556 = vpow.pop %v1555
      %v1557 = vmul.f32 %v1539, 1.442695
      %v1558 = vpow.pop %v1557
      %v1559 = vmul.f32 %v1540, 1.442695
      %v1560 = vpow.pop %v1559
      %v1561 = vmul.f32 %v1541, 1.442695
      %v1562 = vpow.pop %v1561
      %v1563 = vmul.f32 %v1542, 1.442695
      %v1564 = vpow.pop %v1563
      %v1565 = vmul.f32 %v1543, 1.442695
      %v1566 = vpow.pop %v1565
      %v1567 = vmul.f32 %v1544, 1.442695
      %v1568 = vpow.pop %v1567
      %v1569 = vmul.f32 %v1545, 1.442695
      %v1570 = vpow.pop %v1569
      %v1571 = vmul.f32 %v1546, 1.442695
      %v1572 = vpow.pop %v1571
      %v1573 = vmul.f32 %v1547, 1.442695
      %v1574 = vpow.pop %v1573
      %v1575 = vmul.f32 %v1548, 1.442695
      %v1576 = vpow.pop %v1575
      %v1577 = vmul.f32 %v1549, 1.442695
      %v1578 = vpow.pop %v1577
      %v1579 = vmul.f32 %v1550, 1.442695
      %v1580 = vpow.pop %v1579
      %v1581 = vmul.f32 %v1551, 1.442695
      %v1582 = vpow.pop %v1581
      %v1583 = vmul.f32 %v1552, 1.442695
      %v1584 = vpow.pop %v1583
      %v1585 = vadd.f32 %v1554, 1.0
      %v1586 = vlog2.pop %v1585
      %v1587 = vmul.f32 %v1586, 0.6931472
      %v1588 = vmul.f32 -0.5, %v1554
      %v1589 = vadd.f32 %v1588, 1.0
      %v1590 = vmul.f32 %v1589, %v1554
      %v1591 = vand.u32 2147483647, %v1554
      %vm1592 = vcmp.lt.f32.partialorder %v1591, 0.0004427343
      %v1593 = vsel %vm1592, %v1590, %v1587
      %v1594 = vadd.f32 %v1556, 1.0
      %v1595 = vlog2.pop %v1594
      %v1596 = vmul.f32 %v1595, 0.6931472
      %v1597 = vmul.f32 -0.5, %v1556
      %v1598 = vadd.f32 %v1597, 1.0
      %v1599 = vmul.f32 %v1598, %v1556
      %v1600 = vand.u32 2147483647, %v1556
      %vm1601 = vcmp.lt.f32.partialorder %v1600, 0.0004427343
      %v1602 = vsel %vm1601, %v1599, %v1596
      %v1603 = vadd.f32 %v1558, 1.0
      %v1604 = vlog2.pop %v1603
      %v1605 = vmul.f32 %v1604, 0.6931472
      %v1606 = vmul.f32 -0.5, %v1558
      %v1607 = vadd.f32 %v1606, 1.0
      %v1608 = vmul.f32 %v1607, %v1558
      %v1609 = vand.u32 2147483647, %v1558
      %vm1610 = vcmp.lt.f32.partialorder %v1609, 0.0004427343
      %v1611 = vsel %vm1610, %v1608, %v1605
      %v1612 = vadd.f32 %v1560, 1.0
      %v1613 = vlog2.pop %v1612
      %v1614 = vmul.f32 %v1613, 0.6931472
      %v1615 = vmul.f32 -0.5, %v1560
      %v1616 = vadd.f32 %v1615, 1.0
      %v1617 = vmul.f32 %v1616, %v1560
      %v1618 = vand.u32 2147483647, %v1560
      %vm1619 = vcmp.lt.f32.partialorder %v1618, 0.0004427343
      %v1620 = vsel %vm1619, %v1617, %v1614
      %v1621 = vadd.f32 %v1562, 1.0
      %v1622 = vlog2.pop %v1621
      %v1623 = vmul.f32 %v1622, 0.6931472
      %v1624 = vmul.f32 -0.5, %v1562
      %v1625 = vadd.f32 %v1624, 1.0
      %v1626 = vmul.f32 %v1625, %v1562
      %v1627 = vand.u32 2147483647, %v1562
      %vm1628 = vcmp.lt.f32.partialorder %v1627, 0.0004427343
      %v1629 = vsel %vm1628, %v1626, %v1623
      %v1630 = vadd.f32 %v1564, 1.0
      %v1631 = vlog2.pop %v1630
      %v1632 = vmul.f32 %v1631, 0.6931472
      %v1633 = vmul.f32 -0.5, %v1564
      %v1634 = vadd.f32 %v1633, 1.0
      %v1635 = vmul.f32 %v1634, %v1564
      %v1636 = vand.u32 2147483647, %v1564
      %vm1637 = vcmp.lt.f32.partialorder %v1636, 0.0004427343
      %v1638 = vsel %vm1637, %v1635, %v1632
      %v1639 = vadd.f32 %v1566, 1.0
      %v1640 = vlog2.pop %v1639
      %v1641 = vmul.f32 %v1640, 0.6931472
      %v1642 = vmul.f32 -0.5, %v1566
      %v1643 = vadd.f32 %v1642, 1.0
      %v1644 = vmul.f32 %v1643, %v1566
      %v1645 = vand.u32 2147483647, %v1566
      %vm1646 = vcmp.lt.f32.partialorder %v1645, 0.0004427343
      %v1647 = vsel %vm1646, %v1644, %v1641
      %v1648 = vadd.f32 %v1568, 1.0
      %v1649 = vlog2.pop %v1648
      %v1650 = vmul.f32 %v1649, 0.6931472
      %v1651 = vmul.f32 -0.5, %v1568
      %v1652 = vadd.f32 %v1651, 1.0
      %v1653 = vmul.f32 %v1652, %v1568
      %v1654 = vand.u32 2147483647, %v1568
      %vm1655 = vcmp.lt.f32.partialorder %v1654, 0.0004427343
      %v1656 = vsel %vm1655, %v1653, %v1650
      %v1657 = vadd.f32 %v1570, 1.0
      %v1658 = vlog2.pop %v1657
      %v1659 = vmul.f32 %v1658, 0.6931472
      %v1660 = vmul.f32 -0.5, %v1570
      %v1661 = vadd.f32 %v1660, 1.0
      %v1662 = vmul.f32 %v1661, %v1570
      %v1663 = vand.u32 2147483647, %v1570
      %vm1664 = vcmp.lt.f32.partialorder %v1663, 0.0004427343
      %v1665 = vsel %vm1664, %v1662, %v1659
      %v1666 = vadd.f32 %v1572, 1.0
      %v1667 = vlog2.pop %v1666
      %v1668 = vmul.f32 %v1667, 0.6931472
      %v1669 = vmul.f32 -0.5, %v1572
      %v1670 = vadd.f32 %v1669, 1.0
      %v1671 = vmul.f32 %v1670, %v1572
      %v1672 = vand.u32 2147483647, %v1572
      %vm1673 = vcmp.lt.f32.partialorder %v1672, 0.0004427343
      %v1674 = vsel %vm1673, %v1671, %v1668
      %v1675 = vadd.f32 %v1574, 1.0
      %v1676 = vlog2.pop %v1675
      %v1677 = vmul.f32 %v1676, 0.6931472
      %v1678 = vmul.f32 -0.5, %v1574
      %v1679 = vadd.f32 %v1678, 1.0
      %v1680 = vmul.f32 %v1679, %v1574
      %v1681 = vand.u32 2147483647, %v1574
      %vm1682 = vcmp.lt.f32.partialorder %v1681, 0.0004427343
      %v1683 = vsel %vm1682, %v1680, %v1677
      %v1684 = vadd.f32 %v1576, 1.0
      %v1685 = vlog2.pop %v1684
      %v1686 = vmul.f32 %v1685, 0.6931472
      %v1687 = vmul.f32 -0.5, %v1576
      %v1688 = vadd.f32 %v1687, 1.0
      %v1689 = vmul.f32 %v1688, %v1576
      %v1690 = vand.u32 2147483647, %v1576
      %vm1691 = vcmp.lt.f32.partialorder %v1690, 0.0004427343
      %v1692 = vsel %vm1691, %v1689, %v1686
      %v1693 = vadd.f32 %v1578, 1.0
      %v1694 = vlog2.pop %v1693
      %v1695 = vmul.f32 %v1694, 0.6931472
      %v1696 = vmul.f32 -0.5, %v1578
      %v1697 = vadd.f32 %v1696, 1.0
      %v1698 = vmul.f32 %v1697, %v1578
      %v1699 = vand.u32 2147483647, %v1578
      %vm1700 = vcmp.lt.f32.partialorder %v1699, 0.0004427343
      %v1701 = vsel %vm1700, %v1698, %v1695
      %v1702 = vadd.f32 %v1580, 1.0
      %v1703 = vlog2.pop %v1702
      %v1704 = vmul.f32 %v1703, 0.6931472
      %v1705 = vmul.f32 -0.5, %v1580
      %v1706 = vadd.f32 %v1705, 1.0
      %v1707 = vmul.f32 %v1706, %v1580
      %v1708 = vand.u32 2147483647, %v1580
      %vm1709 = vcmp.lt.f32.partialorder %v1708, 0.0004427343
      %v1710 = vsel %vm1709, %v1707, %v1704
      %v1711 = vadd.f32 %v1582, 1.0
      %v1712 = vlog2.pop %v1711
      %v1713 = vmul.f32 %v1712, 0.6931472
      %v1714 = vmul.f32 -0.5, %v1582
      %v1715 = vadd.f32 %v1714, 1.0
      %v1716 = vmul.f32 %v1715, %v1582
      %v1717 = vand.u32 2147483647, %v1582
      %vm1718 = vcmp.lt.f32.partialorder %v1717, 0.0004427343
      %v1719 = vsel %vm1718, %v1716, %v1713
      %v1720 = vadd.f32 %v1584, 1.0
      %v1721 = vlog2.pop %v1720
      %v1722 = vmul.f32 %v1721, 0.6931472
      %v1723 = vmul.f32 -0.5, %v1584
      %v1724 = vadd.f32 %v1723, 1.0
      %v1725 = vmul.f32 %v1724, %v1584
      %v1726 = vand.u32 2147483647, %v1584
      %vm1727 = vcmp.lt.f32.partialorder %v1726, 0.0004427343
      %v1728 = vsel %vm1727, %v1725, %v1722
      %v1729 = vadd.f32 %v1505, %v1593
      %v1730 = vadd.f32 %v1506, %v1602
      %v1731 = vadd.f32 %v1507, %v1611
      %v1732 = vadd.f32 %v1508, %v1620
      %v1733 = vadd.f32 %v1509, %v1629
      %v1734 = vadd.f32 %v1510, %v1638
      %v1735 = vadd.f32 %v1511, %v1647
      %v1736 = vadd.f32 %v1512, %v1656
      %v1737 = vadd.f32 %v1513, %v1665
      %v1738 = vadd.f32 %v1514, %v1674
      %v1739 = vadd.f32 %v1515, %v1683
      %v1740 = vadd.f32 %v1516, %v1692
      %v1741 = vadd.f32 %v1517, %v1701
      %v1742 = vadd.f32 %v1518, %v1710
      %v1743 = vadd.f32 %v1519, %v1719
      %v1744 = vadd.f32 %v1520, %v1728
      %v1745 = vadd.f32 %v1729, 1e-06
      %v1746 = vadd.f32 %v1730, 1e-06
      %v1747 = vadd.f32 %v1731, 1e-06
      %v1748 = vadd.f32 %v1732, 1e-06
      %v1749 = vadd.f32 %v1733, 1e-06
      %v1750 = vadd.f32 %v1734, 1e-06
      %v1751 = vadd.f32 %v1735, 1e-06
      %v1752 = vadd.f32 %v1736, 1e-06
      %v1753 = vadd.f32 %v1737, 1e-06
      %v1754 = vadd.f32 %v1738, 1e-06
      %v1755 = vadd.f32 %v1739, 1e-06
      %v1756 = vadd.f32 %v1740, 1e-06
      %v1757 = vadd.f32 %v1741, 1e-06
      %v1758 = vadd.f32 %v1742, 1e-06
      %v1759 = vadd.f32 %v1743, 1e-06
      %v1760 = vadd.f32 %v1744, 1e-06
      %v1761 = vld [vmem:[%s485] sm:$0xff]
      %v1762 = vld [vmem:[%s485 + $0x8] sm:$0xff]
      %v1763 = vld [vmem:[%s485 + $0x10] sm:$0xff]
      %v1764 = vld [vmem:[%s485 + $0x18] sm:$0xff]
      %v1765 = vld [vmem:[%s485 + $0x20] sm:$0xff]
      %v1766 = vld [vmem:[%s485 + $0x28] sm:$0xff]
      %v1767 = vld [vmem:[%s485 + $0x30] sm:$0xff]
      %v1768 = vld [vmem:[%s485 + $0x38] sm:$0xff]
      %v1769 = vld [vmem:[%s485 + $0x40] sm:$0xff]
      %v1770 = vld [vmem:[%s485 + $0x48] sm:$0xff]
      %v1771 = vld [vmem:[%s485 + $0x50] sm:$0xff]
      %v1772 = vld [vmem:[%s485 + $0x58] sm:$0xff]
      %v1773 = vld [vmem:[%s485 + $0x60] sm:$0xff]
      %v1774 = vld [vmem:[%s485 + $0x68] sm:$0xff]
      %v1775 = vld [vmem:[%s485 + $0x70] sm:$0xff]
      %v1776 = vld [vmem:[%s485 + $0x78] sm:$0xff]
      %v1777 = vmul.f32 %v1745, %v1761
      %v1778 = vmul.f32 %v1746, %v1762
      %v1779 = vmul.f32 %v1747, %v1763
      %v1780 = vmul.f32 %v1748, %v1764
      %v1781 = vmul.f32 %v1749, %v1765
      %v1782 = vmul.f32 %v1750, %v1766
      %v1783 = vmul.f32 %v1751, %v1767
      %v1784 = vmul.f32 %v1752, %v1768
      %v1785 = vmul.f32 %v1753, %v1769
      %v1786 = vmul.f32 %v1754, %v1770
      %v1787 = vmul.f32 %v1755, %v1771
      %v1788 = vmul.f32 %v1756, %v1772
      %v1789 = vmul.f32 %v1757, %v1773
      %v1790 = vmul.f32 %v1758, %v1774
      %v1791 = vmul.f32 %v1759, %v1775
      %v1792 = vmul.f32 %v1760, %v1776
      %v1793 = vadd.f32 %v1331, %v1777
      %v1794 = vadd.f32 %v1334, %v1778
      %v1795 = vadd.f32 %v1339, %v1779
      %v1796 = vadd.f32 %v1342, %v1780
      %v1797 = vadd.f32 %v1347, %v1781
      %v1798 = vadd.f32 %v1350, %v1782
      %v1799 = vadd.f32 %v1355, %v1783
      %v1800 = vadd.f32 %v1358, %v1784
      %v1801 = vadd.f32 %v1363, %v1785
      %v1802 = vadd.f32 %v1366, %v1786
      %v1803 = vadd.f32 %v1371, %v1787
      %v1804 = vadd.f32 %v1374, %v1788
      %v1805 = vadd.f32 %v1379, %v1789
      %v1806 = vadd.f32 %v1382, %v1790
      %v1807 = vadd.f32 %v1387, %v1791
      %v1808 = vadd.f32 %v1390, %v1792
      %1825 = vrot.lane.b32.xlu0 %v1745, 8
      %v1826 = vpop.permute.xlu0 %1825
      %1827 = vrot.lane.b32.xlu0 %v1746, 8
      %v1828 = vpop.permute.xlu0 %1827
      %1829 = vrot.lane.b32.xlu0 %v1747, 8
      %v1830 = vpop.permute.xlu0 %1829
      %1831 = vrot.lane.b32.xlu0 %v1748, 8
      %v1832 = vpop.permute.xlu0 %1831
      %1833 = vrot.lane.b32.xlu0 %v1749, 8
      %v1834 = vpop.permute.xlu0 %1833
      %1835 = vrot.lane.b32.xlu0 %v1750, 8
      %v1836 = vpop.permute.xlu0 %1835
      %1837 = vrot.lane.b32.xlu0 %v1751, 8
      %v1838 = vpop.permute.xlu0 %1837
      %1839 = vrot.lane.b32.xlu0 %v1752, 8
      %v1840 = vpop.permute.xlu0 %1839
      %1841 = vrot.lane.b32.xlu0 %v1753, 8
      %v1842 = vpop.permute.xlu0 %1841
      %1843 = vrot.lane.b32.xlu0 %v1754, 8
      %v1844 = vpop.permute.xlu0 %1843
      %1845 = vrot.lane.b32.xlu0 %v1755, 8
      %v1846 = vpop.permute.xlu0 %1845
      %1847 = vrot.lane.b32.xlu0 %v1756, 8
      %v1848 = vpop.permute.xlu0 %1847
      %1849 = vrot.lane.b32.xlu0 %v1757, 8
      %v1850 = vpop.permute.xlu0 %1849
      %1851 = vrot.lane.b32.xlu0 %v1758, 8
      %v1852 = vpop.permute.xlu0 %1851
      %1853 = vrot.lane.b32.xlu0 %v1759, 8
      %v1854 = vpop.permute.xlu0 %1853
      %1855 = vrot.lane.b32.xlu0 %v1760, 8
      %v1856 = vpop.permute.xlu0 %1855
      %1889 = vrot.lane.b32.xlu0 %v1793, 16
      %v1890 = vpop.permute.xlu0 %1889
      %1891 = vrot.lane.b32.xlu0 %v1794, 16
      %v1892 = vpop.permute.xlu0 %1891
      %1893 = vrot.lane.b32.xlu0 %v1795, 16
      %v1894 = vpop.permute.xlu0 %1893
      %1895 = vrot.lane.b32.xlu0 %v1796, 16
      %v1896 = vpop.permute.xlu0 %1895
      %1897 = vrot.lane.b32.xlu0 %v1797, 16
      %v1898 = vpop.permute.xlu0 %1897
      %1899 = vrot.lane.b32.xlu0 %v1798, 16
      %v1900 = vpop.permute.xlu0 %1899
      %1901 = vrot.lane.b32.xlu0 %v1799, 16
      %v1902 = vpop.permute.xlu0 %1901
      %1903 = vrot.lane.b32.xlu0 %v1800, 16
      %v1904 = vpop.permute.xlu0 %1903
      %1905 = vrot.lane.b32.xlu0 %v1801, 16
      %v1906 = vpop.permute.xlu0 %1905
      %1907 = vrot.lane.b32.xlu0 %v1802, 16
      %v1908 = vpop.permute.xlu0 %1907
      %1909 = vrot.lane.b32.xlu0 %v1803, 16
      %v1910 = vpop.permute.xlu0 %1909
      %1911 = vrot.lane.b32.xlu0 %v1804, 16
      %v1912 = vpop.permute.xlu0 %1911
      %1913 = vrot.lane.b32.xlu0 %v1805, 16
      %v1914 = vpop.permute.xlu0 %1913
      %1915 = vrot.lane.b32.xlu0 %v1806, 16
      %v1916 = vpop.permute.xlu0 %1915
      %1917 = vrot.lane.b32.xlu0 %v1807, 16
      %v1918 = vpop.permute.xlu0 %1917
      %1919 = vrot.lane.b32.xlu0 %v1808, 16
      %v1920 = vpop.permute.xlu0 %1919
      %vm1937 = vcmask 64512
      %v1938 = vsel %vm1937, %v1331, %v1826
      %v1939 = vsel %vm1937, %v1334, %v1828
      %v1940 = vsel %vm1937, %v1339, %v1830
      %v1941 = vsel %vm1937, %v1342, %v1832
      %v1942 = vsel %vm1937, %v1347, %v1834
      %v1943 = vsel %vm1937, %v1350, %v1836
      %v1944 = vsel %vm1937, %v1355, %v1838
      %v1945 = vsel %vm1937, %v1358, %v1840
      %v1946 = vsel %vm1937, %v1363, %v1842
      %v1947 = vsel %vm1937, %v1366, %v1844
      %v1948 = vsel %vm1937, %v1371, %v1846
      %v1949 = vsel %vm1937, %v1374, %v1848
      %v1950 = vsel %vm1937, %v1379, %v1850
      %v1951 = vsel %vm1937, %v1382, %v1852
      %v1952 = vsel %vm1937, %v1387, %v1854
      %v1953 = vsel %vm1937, %v1390, %v1856
      %v1954 = vsel %vm1271, %v1938, %v1890
      %v1955 = vsel %vm1271, %v1939, %v1892
      %v1956 = vsel %vm1271, %v1940, %v1894
      %v1957 = vsel %vm1271, %v1941, %v1896
      %v1958 = vsel %vm1271, %v1942, %v1898
      %v1959 = vsel %vm1271, %v1943, %v1900
      %v1960 = vsel %vm1271, %v1944, %v1902
      %v1961 = vsel %vm1271, %v1945, %v1904
      %v1962 = vsel %vm1271, %v1946, %v1906
      %v1963 = vsel %vm1271, %v1947, %v1908
      %v1964 = vsel %vm1271, %v1948, %v1910
      %v1965 = vsel %vm1271, %v1949, %v1912
      %v1966 = vsel %vm1271, %v1950, %v1914
      %v1967 = vsel %vm1271, %v1951, %v1916
      %v1968 = vsel %vm1271, %v1952, %v1918
      %v1969 = vsel %vm1271, %v1953, %v1920
      %vm1970 = vcmask 195584
      %1971 = vst.msk [vmem:[%s491] sm:$0xff] %vm1970, %v1954
      %1972 = vst.msk [vmem:[%s491 + $0x8] sm:$0xff] %vm1970, %v1955
      %1973 = vst.msk [vmem:[%s491 + $0x10] sm:$0xff] %vm1970, %v1956
      %1974 = vst.msk [vmem:[%s491 + $0x18] sm:$0xff] %vm1970, %v1957
      %1975 = vst.msk [vmem:[%s491 + $0x20] sm:$0xff] %vm1970, %v1958
      %1976 = vst.msk [vmem:[%s491 + $0x28] sm:$0xff] %vm1970, %v1959
      %1977 = vst.msk [vmem:[%s491 + $0x30] sm:$0xff] %vm1970, %v1960
      %1978 = vst.msk [vmem:[%s491 + $0x38] sm:$0xff] %vm1970, %v1961
      %1979 = vst.msk [vmem:[%s491 + $0x40] sm:$0xff] %vm1970, %v1962
      %1980 = vst.msk [vmem:[%s491 + $0x48] sm:$0xff] %vm1970, %v1963
      %1981 = vst.msk [vmem:[%s491 + $0x50] sm:$0xff] %vm1970, %v1964
      %1982 = vst.msk [vmem:[%s491 + $0x58] sm:$0xff] %vm1970, %v1965
      %1983 = vst.msk [vmem:[%s491 + $0x60] sm:$0xff] %vm1970, %v1966
      %1984 = vst.msk [vmem:[%s491 + $0x68] sm:$0xff] %vm1970, %v1967
      %1985 = vst.msk [vmem:[%s491 + $0x70] sm:$0xff] %vm1970, %v1968
      %1986 = vst.msk [vmem:[%s491 + $0x78] sm:$0xff] %vm1970, %v1969
      %s1987 = smul.u32 16, %s25
      %p1988 = scmp.lt.s32.totalorder %s1987, 31
      %s1989 = scalar_select %p1988, %s1987, 31
      %s1990 = smul.addr %s1989, 8
      %s1991 = scalar_lea.vmem %s14, %s1990
      // Predicated region
      $region77: #{tpu_custom_call.1} parent=75 // pred_check
        %p1992 = pneg %p347
      $region78: #{tpu_custom_call.1} parent=75 // pred_check_branch
        %1994 = sbr.rel (%p1992) target = $region80
      $region79: #{tpu_custom_call.1} parent=75 // pred_region
        %s1995 = smul.u32 16, %s25
      $region80: #{tpu_custom_call.1} parent=75 // pred_fallthru
        _
    $region76: #{tpu_custom_call.1} parent=5 // pred_fallthru
      _
    %p1996 = scmp.le.s32.totalorder 2, %s20
    // Predicated region
    $region81: #{tpu_custom_call.1} parent=5 // pred_check
      %p1997 = pneg %p1996
    $region82: #{tpu_custom_call.1} parent=5 // pred_check_branch
      %1999 = sbr.rel (%p1997) target = $region84
    $region83: #{tpu_custom_call.1} parent=5 // pred_region
      %s2000 = ssub.s32 %s20, 2
      // Predicated region
      $region85: #{tpu_custom_call.1} parent=83 // pred_check
        %p2001 = pneg %p353
      $region86: #{tpu_custom_call.1} parent=83 // pred_check_branch
        %2003 = sbr.rel (%p2001) target = $region88
      $region87: #{tpu_custom_call.1} parent=83 // pred_region
        %s2004 = smul.u32 16, %s26
        %p2005 = scmp.lt.s32.totalorder %s2004, 31
        %s2006 = scalar_select %p2005, %s2004, 31
        %s2007 = smul.addr %s2006, 8
        %s2008 = scalar_lea.vmem %s14, %s2007
      $region88: #{tpu_custom_call.1} parent=83 // pred_fallthru
        _
    $region84: #{tpu_custom_call.1} parent=5 // pred_fallthru
      _
  $region6: #{tpu_custom_call.1} parent=0 // loop_footer
    %s24 = sadd.s32 1, %s20
  $region7: #{tpu_custom_call.1} parent=0 // loop_footer_branch
    %19 = sbr.rel target = $region3
  $region8: #{tpu_custom_call.1} parent=0 // loop_exit
    _

</llo_original>
